<compile_context>
chip_gen: v7x
topology: tpu7x:2x2x1
jax: 0.10.0
libtpu: 0.0.40
codegen_flags: <defaults>
</compile_context>

<pallas_src>
import jax
import jax.numpy as jnp
from jax.experimental import pallas as pl
from jax.experimental.pallas import tpu as pltpu


# ---------------------------------------------------------------------------
# Kernel: one row tile of TM = TB*N rows (TB windows) per grid step.
# ---------------------------------------------------------------------------
def _window_attn_kernel(x_ref, wqkv_ref, bqkv_ref, bias_ref,
                        wproj_ref, bproj_ref, out_ref):
    TM, C = x_ref.shape
    H, N, _ = bias_ref.shape
    HD = C // H
    TB = TM // N                                           # windows in this tile

    # Fused QKV projection over all TB windows at once (MXU, f32 accumulation).
    qkv = jnp.dot(x_ref[...], wqkv_ref[...],
                  preferred_element_type=jnp.float32) + bqkv_ref[...]   # (TM, 3C)
    qkv_b = qkv.astype(jnp.bfloat16)                       # bf16 operands, f32 accum

    bias = bias_ref[...]                                   # (H, N, N) f32

    # Per-head attention: 2-D lane slices of the (TM, 3C) slab; batched-per-window
    # dots (batch dim = window), no head-axis transposes.
    head_outs = []
    for h in range(H):                                     # static unrolled loop over heads
        q_h = qkv_b[:, h * HD:(h + 1) * HD].reshape(TB, N, HD)           # scale pre-folded
        k_h = qkv_b[:, C + h * HD:C + (h + 1) * HD].reshape(TB, N, HD)
        v_h = qkv_b[:, 2 * C + h * HD:2 * C + (h + 1) * HD].reshape(TB, N, HD)

        # scores: (TB, N, N) = q_h @ k_h^T per window
        s = jax.lax.dot_general(q_h, k_h, (((2,), (2,)), ((0,), (0,))),
                                preferred_element_type=jnp.float32)
        s = s + bias[h][None, :, :]                        # relative-position bias

        # softmax along the key axis
        s = s - jnp.max(s, axis=-1, keepdims=True)
        p = jnp.exp(s)
        p = p * pl.reciprocal(jnp.sum(p, axis=-1, keepdims=True), approx=True)

        # attention output per head: (TB, N, HD) = p @ v_h per window
        o_h = jax.lax.dot_general(p.astype(jnp.bfloat16), v_h,
                                  (((2,), (1,)), ((0,), (0,))),
                                  preferred_element_type=jnp.float32)
        head_outs.append(o_h)

    # Re-interleave heads back to channel layout: (TB, N, H*HD) -> (TM, C).
    attn_out = jnp.concatenate(head_outs, axis=-1).reshape(TM, C)

    # Output projection (MXU, f32 accumulation).
    out = jnp.dot(attn_out.astype(jnp.bfloat16), wproj_ref[...],
                  preferred_element_type=jnp.float32) + bproj_ref[...]
    out_ref[...] = out.astype(out_ref.dtype)


# ---------------------------------------------------------------------------
# Wrapper: parameter prep (scale folding, bf16 cast), window batching, padding.
# ---------------------------------------------------------------------------
def window_attention(x, w_qkv, b_qkv, rel_pos_bias, w_proj, b_proj, *,
                     scale, rows_per_step=512):
    """x: (B_, N_, C); rel_pos_bias: (H, N_, N_). Returns (B_, N_, C)."""
    B, N, C = x.shape
    H = rel_pos_bias.shape[0]
    assert C % H == 0 and N % 8 == 0

    # One-time parameter prep: fold the query scale into the Q columns.
    w_qkv = w_qkv.at[:, :C].multiply(scale)
    b_qkv = b_qkv.at[:, :C].multiply(scale)

    # bf16 MXU operands, f32 bias adds / accumulation inside the kernel.
    w_qkv_b = w_qkv.astype(jnp.bfloat16)
    w_proj_b = w_proj.astype(jnp.bfloat16)
    b_qkv_f = b_qkv.astype(jnp.float32)
    b_proj_f = b_proj.astype(jnp.float32)
    bias_f = rel_pos_bias.astype(jnp.float32)

    # Windows per grid step: aim for >=rows_per_step matmul rows, but keep >=2
    # grid steps whenever possible so both v7x TensorCores get work.
    tb = max(1, min(rows_per_step // N, B))
    if B // tb < 2 and B >= 2:
        tb = pl.cdiv(B, 2)
    B_pad = pl.cdiv(B, tb) * tb

    x_b = x.astype(jnp.bfloat16)
    if B_pad != B:
        x_b = jnp.pad(x_b, ((0, B_pad - B), (0, 0), (0, 0)))
    x2d = x_b.reshape(B_pad * N, C)                        # fold (B, N) into matmul rows
    TM = tb * N
    grid = (B_pad // tb,)

    # TODO(synk): at realistic Swin sizes (C >= 512) single-buffer the constant
    # weight/bias/bias-table blocks (pipeline_mode=pl.Buffered(1)) and re-derive TM
    # against v7x's 64 MiB VMEM; negligible at C=32 so omitted here.
    out2d = pl.pallas_call(
        _window_attn_kernel,
        out_shape=jax.ShapeDtypeStruct((B_pad * N, C), x.dtype),
        grid_spec=pltpu.PrefetchScalarGridSpec(
            num_scalar_prefetch=0,
            grid=grid,
            in_specs=[
                pl.BlockSpec((TM, C), lambda i: (i, 0)),           # x row tile
                pl.BlockSpec((C, 3 * C), lambda i: (0, 0)),        # W_qkv (scale folded)
                pl.BlockSpec((1, 3 * C), lambda i: (0, 0)),        # b_qkv
                pl.BlockSpec((H, N, N), lambda i: (0, 0, 0)),      # rel-pos bias
                pl.BlockSpec((C, C), lambda i: (0, 0)),            # W_proj
                pl.BlockSpec((1, C), lambda i: (0, 0)),            # b_proj
            ],
            out_specs=pl.BlockSpec((TM, C), lambda i: (i, 0)),
        ),
        compiler_params=pltpu.CompilerParams(
            dimension_semantics=("parallel",)),
    )(x2d, w_qkv_b, b_qkv_f, bias_f, w_proj_b, b_proj_f)

    return out2d.reshape(B_pad, N, C)[:B]


# ---------------------------------------------------------------------------
# Glue: relative-position index construction (mirrors the PyTorch __init__).
# ---------------------------------------------------------------------------
def make_relative_position_index(num_queries, window_size):
    coords_h = jnp.arange(num_queries)
    coords_w = jnp.arange(window_size)
    ch, cw = jnp.meshgrid(coords_h, coords_w, indexing='ij')
    coords_flatten = jnp.stack([ch.reshape(-1), cw.reshape(-1)])       # (2, N)
    rel = coords_flatten[:, :, None] - coords_flatten[:, None, :]      # (2, N, N)
    rel = jnp.transpose(rel, (1, 2, 0))                                # (N, N, 2)
    rel = rel.at[:, :, 0].add(num_queries - 1)
    rel = rel.at[:, :, 1].add(window_size - 1)
    rel = rel.at[:, :, 0].multiply(2 * window_size - 1)
    return rel.sum(-1)                                                 # (N, N)


def reference_forward(x, w_qkv, b_qkv, rel_pos_bias, w_proj, b_proj, scale):
    B, N, C = x.shape
    H = rel_pos_bias.shape[0]
    HD = C // H
    qkv = x @ w_qkv + b_qkv
    qkv = qkv.reshape(B, N, 3, H, HD).transpose(2, 0, 3, 1, 4)
    q, k, v = qkv[0], qkv[1], qkv[2]
    attn = (q * scale) @ jnp.swapaxes(k, -2, -1)
    attn = attn + rel_pos_bias[None]
    attn = jax.nn.softmax(attn, axis=-1)
    out = (attn @ v).transpose(0, 2, 1, 3).reshape(B, N, C)
    return out @ w_proj + b_proj


if __name__ == "__main__":
    # Module hyperparameters (small, consistent with the forward pass)
    dim_attention = 32
    num_heads = 4
    num_queries = 8
    window_size = 2
    N_ = num_queries * window_size          # tokens per window = 16
    B_ = 8                                  # number of windows
    head_dim = dim_attention // num_heads
    scale = head_dim ** -0.5

    key = jax.random.PRNGKey(0)
    k_x, k_rpb, k_wqkv, k_bqkv, k_wproj, k_bproj = jax.random.split(key, 6)

    # Deterministic synthetic parameters (shapes follow the module's __init__)
    x = jax.random.normal(k_x, (B_, N_, dim_attention), dtype=jnp.float32)
    rpb_table = 0.02 * jax.random.truncated_normal(
        k_rpb, -2.0, 2.0,
        ((2 * num_queries - 1) * (2 * window_size - 1), num_heads)).astype(jnp.float32)
    w_qkv = 0.05 * jax.random.normal(k_wqkv, (dim_attention, 3 * dim_attention),
                                     dtype=jnp.float32)
    b_qkv = 0.01 * jax.random.normal(k_bqkv, (1, 3 * dim_attention), dtype=jnp.float32)
    w_proj = 0.05 * jax.random.normal(k_wproj, (dim_attention, dim_attention),
                                      dtype=jnp.float32)
    b_proj = 0.01 * jax.random.normal(k_bproj, (1, dim_attention), dtype=jnp.float32)

    # Relative-position bias gather (glue, done once outside the kernel)
    rel_idx = make_relative_position_index(num_queries, window_size)   # (N, N)
    rel_bias = rpb_table[rel_idx.reshape(-1)].reshape(N_, N_, num_heads)
    rel_bias = jnp.transpose(rel_bias, (2, 0, 1)).astype(jnp.float32)  # (H, N, N)

    # TODO(synk): attn_drop/proj_drop are identity in eval mode; the optional
    # additive `mask` path is not exercised (mask=None), matching the reference.
    out = window_attention(x, w_qkv, b_qkv, rel_bias, w_proj, b_proj, scale=scale)
    out = jax.block_until_ready(out)

    ref = reference_forward(x, w_qkv, b_qkv, rel_bias, w_proj, b_proj, scale)
    assert out.shape == (B_, N_, dim_attention)
    # bf16 MXU operands + approx reciprocal => looser tolerance than pure-f32.
    assert jnp.allclose(out, ref, atol=2e-2, rtol=2e-2), "mismatch vs reference"

    print("KERNEL_OK")
</pallas_src>

<mosaic_0001>
module attributes {stable_mosaic.version = 11 : i64} {
  func.func @_window_attn_kernel(%arg0: i32, %arg1: memref<64x32xbf16, #tpu.memory_space<vmem>>, %arg2: memref<32x96xbf16, #tpu.memory_space<vmem>>, %arg3: memref<1x96xf32, #tpu.memory_space<vmem>>, %arg4: memref<4x16x16xf32, #tpu.memory_space<vmem>>, %arg5: memref<32x32xbf16, #tpu.memory_space<vmem>>, %arg6: memref<1x32xf32, #tpu.memory_space<vmem>>, %arg7: memref<64x32xf32, #tpu.memory_space<vmem>>) attributes {dimension_semantics = [#tpu.dimension_semantics<parallel>], iteration_bounds = array<i64: 2>, scalar_prefetch = 0 : i64, scratch_operands = 0 : i64, tpu.core_type = #tpu.core_type<tc>, window_params = [{transform_indices = @transform_0, window_bounds = array<i64: 64, 32>}, {pipeline_mode = #tpu.pipeline_mode<synchronous>, transform_indices = @transform_1, window_bounds = array<i64: 32, 96>}, {pipeline_mode = #tpu.pipeline_mode<synchronous>, transform_indices = @transform_2, window_bounds = array<i64: 1, 96>}, {pipeline_mode = #tpu.pipeline_mode<synchronous>, transform_indices = @transform_3, window_bounds = array<i64: 4, 16, 16>}, {pipeline_mode = #tpu.pipeline_mode<synchronous>, transform_indices = @transform_4, window_bounds = array<i64: 32, 32>}, {pipeline_mode = #tpu.pipeline_mode<synchronous>, transform_indices = @transform_5, window_bounds = array<i64: 1, 32>}, {transform_indices = @transform_6, window_bounds = array<i64: 64, 32>}]} {
    %c0 = arith.constant 0 : index
    %c0_0 = arith.constant 0 : index
    %0 = vector.load %arg1[%c0, %c0_0] : memref<64x32xbf16, #tpu.memory_space<vmem>>, vector<64x32xbf16>
    %c0_1 = arith.constant 0 : index
    %c0_2 = arith.constant 0 : index
    %1 = vector.load %arg2[%c0_1, %c0_2] : memref<32x96xbf16, #tpu.memory_space<vmem>>, vector<32x96xbf16>
    %cst = arith.constant dense<0.000000e+00> : vector<64x96xf32>
    %2 = tpu.matmul %0, %1, %cst {dimension_numbers = #tpu.dot_dimension_numbers<[1], [0], [0], [1], [0, 0, 1, 1], [], []>} : vector<64x32xbf16>, vector<32x96xbf16>, vector<64x96xf32> -> vector<64x96xf32>
    %c0_3 = arith.constant 0 : index
    %c0_4 = arith.constant 0 : index
    %3 = vector.load %arg3[%c0_3, %c0_4] : memref<1x96xf32, #tpu.memory_space<vmem>>, vector<1x96xf32>
    %4 = vector.broadcast %3 : vector<1x96xf32> to vector<64x96xf32>
    %5 = arith.addf %2, %4 : vector<64x96xf32>
    %6 = arith.truncf %5 : vector<64x96xf32> to vector<64x96xbf16>
    %c0_5 = arith.constant 0 : index
    %c0_6 = arith.constant 0 : index
    %c0_7 = arith.constant 0 : index
    %7 = vector.load %arg4[%c0_5, %c0_6, %c0_7] : memref<4x16x16xf32, #tpu.memory_space<vmem>>, vector<4x16x16xf32>
    %8 = vector.extract_strided_slice %6 {offsets = [0, 0], sizes = [64, 8], strides = [1, 1]} : vector<64x96xbf16> to vector<64x8xbf16>
    %9 = vector.shape_cast %8 : vector<64x8xbf16> to vector<4x16x8xbf16>
    %10 = vector.extract_strided_slice %6 {offsets = [0, 32], sizes = [64, 8], strides = [1, 1]} : vector<64x96xbf16> to vector<64x8xbf16>
    %11 = vector.shape_cast %10 : vector<64x8xbf16> to vector<4x16x8xbf16>
    %12 = vector.extract_strided_slice %6 {offsets = [0, 64], sizes = [64, 8], strides = [1, 1]} : vector<64x96xbf16> to vector<64x8xbf16>
    %13 = vector.shape_cast %12 : vector<64x8xbf16> to vector<4x16x8xbf16>
    %cst_8 = arith.constant dense<0.000000e+00> : vector<4x16x16xf32>
    %14 = tpu.matmul %9, %11, %cst_8 {dimension_numbers = #tpu.dot_dimension_numbers<[2], [2], [1], [1], [0, 0, 0, 1, 1, 1], [0], [0]>} : vector<4x16x8xbf16>, vector<4x16x8xbf16>, vector<4x16x16xf32> -> vector<4x16x16xf32>
    %15 = vector.extract_strided_slice %7 {offsets = [0, 0, 0], sizes = [1, 16, 16], strides = [1, 1, 1]} : vector<4x16x16xf32> to vector<1x16x16xf32>
    %16 = vector.shape_cast %15 : vector<1x16x16xf32> to vector<16x16xf32>
    %17 = vector.shape_cast %16 : vector<16x16xf32> to vector<1x16x16xf32>
    %18 = vector.broadcast %17 : vector<1x16x16xf32> to vector<4x16x16xf32>
    %19 = arith.addf %14, %18 : vector<4x16x16xf32>
    %cst_9 = arith.constant dense<0xFF800000> : vector<4x16xf32>
    %20 = vector.multi_reduction <maximumf>, %19, %cst_9 [2] : vector<4x16x16xf32> to vector<4x16xf32>
    %21 = vector.shape_cast %20 : vector<4x16xf32> to vector<4x16x1xf32>
    %22 = vector.broadcast %21 : vector<4x16x1xf32> to vector<4x16x16xf32>
    %23 = arith.subf %19, %22 : vector<4x16x16xf32>
    %24 = math.exp %23 : vector<4x16x16xf32>
    %cst_10 = arith.constant dense<0.000000e+00> : vector<4x16xf32>
    %25 = vector.multi_reduction <add>, %24, %cst_10 [2] : vector<4x16x16xf32> to vector<4x16xf32>
    %26 = vector.shape_cast %25 : vector<4x16xf32> to vector<4x16x1xf32>
    %27 = tpu.reciprocal %26 {approx = true} : vector<4x16x1xf32> -> vector<4x16x1xf32>
    %28 = vector.broadcast %27 : vector<4x16x1xf32> to vector<4x16x16xf32>
    %29 = arith.mulf %24, %28 : vector<4x16x16xf32>
    %30 = arith.truncf %29 : vector<4x16x16xf32> to vector<4x16x16xbf16>
    %cst_11 = arith.constant dense<0.000000e+00> : vector<4x16x8xf32>
    %31 = tpu.matmul %30, %13, %cst_11 {dimension_numbers = #tpu.dot_dimension_numbers<[2], [1], [1], [2], [0, 0, 0, 1, 1, 2], [0], [0]>} : vector<4x16x16xbf16>, vector<4x16x8xbf16>, vector<4x16x8xf32> -> vector<4x16x8xf32>
    %32 = vector.extract_strided_slice %6 {offsets = [0, 8], sizes = [64, 8], strides = [1, 1]} : vector<64x96xbf16> to vector<64x8xbf16>
    %33 = vector.shape_cast %32 : vector<64x8xbf16> to vector<4x16x8xbf16>
    %34 = vector.extract_strided_slice %6 {offsets = [0, 40], sizes = [64, 8], strides = [1, 1]} : vector<64x96xbf16> to vector<64x8xbf16>
    %35 = vector.shape_cast %34 : vector<64x8xbf16> to vector<4x16x8xbf16>
    %36 = vector.extract_strided_slice %6 {offsets = [0, 72], sizes = [64, 8], strides = [1, 1]} : vector<64x96xbf16> to vector<64x8xbf16>
    %37 = vector.shape_cast %36 : vector<64x8xbf16> to vector<4x16x8xbf16>
    %cst_12 = arith.constant dense<0.000000e+00> : vector<4x16x16xf32>
    %38 = tpu.matmul %33, %35, %cst_12 {dimension_numbers = #tpu.dot_dimension_numbers<[2], [2], [1], [1], [0, 0, 0, 1, 1, 1], [0], [0]>} : vector<4x16x8xbf16>, vector<4x16x8xbf16>, vector<4x16x16xf32> -> vector<4x16x16xf32>
    %39 = vector.extract_strided_slice %7 {offsets = [1, 0, 0], sizes = [1, 16, 16], strides = [1, 1, 1]} : vector<4x16x16xf32> to vector<1x16x16xf32>
    %40 = vector.shape_cast %39 : vector<1x16x16xf32> to vector<16x16xf32>
    %41 = vector.shape_cast %40 : vector<16x16xf32> to vector<1x16x16xf32>
    %42 = vector.broadcast %41 : vector<1x16x16xf32> to vector<4x16x16xf32>
    %43 = arith.addf %38, %42 : vector<4x16x16xf32>
    %cst_13 = arith.constant dense<0xFF800000> : vector<4x16xf32>
    %44 = vector.multi_reduction <maximumf>, %43, %cst_13 [2] : vector<4x16x16xf32> to vector<4x16xf32>
    %45 = vector.shape_cast %44 : vector<4x16xf32> to vector<4x16x1xf32>
    %46 = vector.broadcast %45 : vector<4x16x1xf32> to vector<4x16x16xf32>
    %47 = arith.subf %43, %46 : vector<4x16x16xf32>
    %48 = math.exp %47 : vector<4x16x16xf32>
    %cst_14 = arith.constant dense<0.000000e+00> : vector<4x16xf32>
    %49 = vector.multi_reduction <add>, %48, %cst_14 [2] : vector<4x16x16xf32> to vector<4x16xf32>
    %50 = vector.shape_cast %49 : vector<4x16xf32> to vector<4x16x1xf32>
    %51 = tpu.reciprocal %50 {approx = true} : vector<4x16x1xf32> -> vector<4x16x1xf32>
    %52 = vector.broadcast %51 : vector<4x16x1xf32> to vector<4x16x16xf32>
    %53 = arith.mulf %48, %52 : vector<4x16x16xf32>
    %54 = arith.truncf %53 : vector<4x16x16xf32> to vector<4x16x16xbf16>
    %cst_15 = arith.constant dense<0.000000e+00> : vector<4x16x8xf32>
    %55 = tpu.matmul %54, %37, %cst_15 {dimension_numbers = #tpu.dot_dimension_numbers<[2], [1], [1], [2], [0, 0, 0, 1, 1, 2], [0], [0]>} : vector<4x16x16xbf16>, vector<4x16x8xbf16>, vector<4x16x8xf32> -> vector<4x16x8xf32>
    %56 = vector.extract_strided_slice %6 {offsets = [0, 16], sizes = [64, 8], strides = [1, 1]} : vector<64x96xbf16> to vector<64x8xbf16>
    %57 = vector.shape_cast %56 : vector<64x8xbf16> to vector<4x16x8xbf16>
    %58 = vector.extract_strided_slice %6 {offsets = [0, 48], sizes = [64, 8], strides = [1, 1]} : vector<64x96xbf16> to vector<64x8xbf16>
    %59 = vector.shape_cast %58 : vector<64x8xbf16> to vector<4x16x8xbf16>
    %60 = vector.extract_strided_slice %6 {offsets = [0, 80], sizes = [64, 8], strides = [1, 1]} : vector<64x96xbf16> to vector<64x8xbf16>
    %61 = vector.shape_cast %60 : vector<64x8xbf16> to vector<4x16x8xbf16>
    %cst_16 = arith.constant dense<0.000000e+00> : vector<4x16x16xf32>
    %62 = tpu.matmul %57, %59, %cst_16 {dimension_numbers = #tpu.dot_dimension_numbers<[2], [2], [1], [1], [0, 0, 0, 1, 1, 1], [0], [0]>} : vector<4x16x8xbf16>, vector<4x16x8xbf16>, vector<4x16x16xf32> -> vector<4x16x16xf32>
    %63 = vector.extract_strided_slice %7 {offsets = [2, 0, 0], sizes = [1, 16, 16], strides = [1, 1, 1]} : vector<4x16x16xf32> to vector<1x16x16xf32>
    %64 = vector.shape_cast %63 : vector<1x16x16xf32> to vector<16x16xf32>
    %65 = vector.shape_cast %64 : vector<16x16xf32> to vector<1x16x16xf32>
    %66 = vector.broadcast %65 : vector<1x16x16xf32> to vector<4x16x16xf32>
    %67 = arith.addf %62, %66 : vector<4x16x16xf32>
    %cst_17 = arith.constant dense<0xFF800000> : vector<4x16xf32>
    %68 = vector.multi_reduction <maximumf>, %67, %cst_17 [2] : vector<4x16x16xf32> to vector<4x16xf32>
    %69 = vector.shape_cast %68 : vector<4x16xf32> to vector<4x16x1xf32>
    %70 = vector.broadcast %69 : vector<4x16x1xf32> to vector<4x16x16xf32>
    %71 = arith.subf %67, %70 : vector<4x16x16xf32>
    %72 = math.exp %71 : vector<4x16x16xf32>
    %cst_18 = arith.constant dense<0.000000e+00> : vector<4x16xf32>
    %73 = vector.multi_reduction <add>, %72, %cst_18 [2] : vector<4x16x16xf32> to vector<4x16xf32>
    %74 = vector.shape_cast %73 : vector<4x16xf32> to vector<4x16x1xf32>
    %75 = tpu.reciprocal %74 {approx = true} : vector<4x16x1xf32> -> vector<4x16x1xf32>
    %76 = vector.broadcast %75 : vector<4x16x1xf32> to vector<4x16x16xf32>
    %77 = arith.mulf %72, %76 : vector<4x16x16xf32>
    %78 = arith.truncf %77 : vector<4x16x16xf32> to vector<4x16x16xbf16>
    %cst_19 = arith.constant dense<0.000000e+00> : vector<4x16x8xf32>
    %79 = tpu.matmul %78, %61, %cst_19 {dimension_numbers = #tpu.dot_dimension_numbers<[2], [1], [1], [2], [0, 0, 0, 1, 1, 2], [0], [0]>} : vector<4x16x16xbf16>, vector<4x16x8xbf16>, vector<4x16x8xf32> -> vector<4x16x8xf32>
    %80 = vector.extract_strided_slice %6 {offsets = [0, 24], sizes = [64, 8], strides = [1, 1]} : vector<64x96xbf16> to vector<64x8xbf16>
    %81 = vector.shape_cast %80 : vector<64x8xbf16> to vector<4x16x8xbf16>
    %82 = vector.extract_strided_slice %6 {offsets = [0, 56], sizes = [64, 8], strides = [1, 1]} : vector<64x96xbf16> to vector<64x8xbf16>
    %83 = vector.shape_cast %82 : vector<64x8xbf16> to vector<4x16x8xbf16>
    %84 = vector.extract_strided_slice %6 {offsets = [0, 88], sizes = [64, 8], strides = [1, 1]} : vector<64x96xbf16> to vector<64x8xbf16>
    %85 = vector.shape_cast %84 : vector<64x8xbf16> to vector<4x16x8xbf16>
    %cst_20 = arith.constant dense<0.000000e+00> : vector<4x16x16xf32>
    %86 = tpu.matmul %81, %83, %cst_20 {dimension_numbers = #tpu.dot_dimension_numbers<[2], [2], [1], [1], [0, 0, 0, 1, 1, 1], [0], [0]>} : vector<4x16x8xbf16>, vector<4x16x8xbf16>, vector<4x16x16xf32> -> vector<4x16x16xf32>
    %87 = vector.extract_strided_slice %7 {offsets = [3, 0, 0], sizes = [1, 16, 16], strides = [1, 1, 1]} : vector<4x16x16xf32> to vector<1x16x16xf32>
    %88 = vector.shape_cast %87 : vector<1x16x16xf32> to vector<16x16xf32>
    %89 = vector.shape_cast %88 : vector<16x16xf32> to vector<1x16x16xf32>
    %90 = vector.broadcast %89 : vector<1x16x16xf32> to vector<4x16x16xf32>
    %91 = arith.addf %86, %90 : vector<4x16x16xf32>
    %cst_21 = arith.constant dense<0xFF800000> : vector<4x16xf32>
    %92 = vector.multi_reduction <maximumf>, %91, %cst_21 [2] : vector<4x16x16xf32> to vector<4x16xf32>
    %93 = vector.shape_cast %92 : vector<4x16xf32> to vector<4x16x1xf32>
    %94 = vector.broadcast %93 : vector<4x16x1xf32> to vector<4x16x16xf32>
    %95 = arith.subf %91, %94 : vector<4x16x16xf32>
    %96 = math.exp %95 : vector<4x16x16xf32>
    %cst_22 = arith.constant dense<0.000000e+00> : vector<4x16xf32>
    %97 = vector.multi_reduction <add>, %96, %cst_22 [2] : vector<4x16x16xf32> to vector<4x16xf32>
    %98 = vector.shape_cast %97 : vector<4x16xf32> to vector<4x16x1xf32>
    %99 = tpu.reciprocal %98 {approx = true} : vector<4x16x1xf32> -> vector<4x16x1xf32>
    %100 = vector.broadcast %99 : vector<4x16x1xf32> to vector<4x16x16xf32>
    %101 = arith.mulf %96, %100 : vector<4x16x16xf32>
    %102 = arith.truncf %101 : vector<4x16x16xf32> to vector<4x16x16xbf16>
    %cst_23 = arith.constant dense<0.000000e+00> : vector<4x16x8xf32>
    %103 = tpu.matmul %102, %85, %cst_23 {dimension_numbers = #tpu.dot_dimension_numbers<[2], [1], [1], [2], [0, 0, 0, 1, 1, 2], [0], [0]>} : vector<4x16x16xbf16>, vector<4x16x8xbf16>, vector<4x16x8xf32> -> vector<4x16x8xf32>
    %104 = tpu.concatenate %31, %55, %79, %103 in 2 : vector<4x16x8xf32>, vector<4x16x8xf32>, vector<4x16x8xf32>, vector<4x16x8xf32> -> vector<4x16x32xf32>
    %105 = vector.shape_cast %104 : vector<4x16x32xf32> to vector<64x32xf32>
    %106 = arith.truncf %105 : vector<64x32xf32> to vector<64x32xbf16>
    %c0_24 = arith.constant 0 : index
    %c0_25 = arith.constant 0 : index
    %107 = vector.load %arg5[%c0_24, %c0_25] : memref<32x32xbf16, #tpu.memory_space<vmem>>, vector<32x32xbf16>
    %cst_26 = arith.constant dense<0.000000e+00> : vector<64x32xf32>
    %108 = tpu.matmul %106, %107, %cst_26 {dimension_numbers = #tpu.dot_dimension_numbers<[1], [0], [0], [1], [0, 0, 1, 1], [], []>} : vector<64x32xbf16>, vector<32x32xbf16>, vector<64x32xf32> -> vector<64x32xf32>
    %c0_27 = arith.constant 0 : index
    %c0_28 = arith.constant 0 : index
    %109 = vector.load %arg6[%c0_27, %c0_28] : memref<1x32xf32, #tpu.memory_space<vmem>>, vector<1x32xf32>
    %110 = vector.broadcast %109 : vector<1x32xf32> to vector<64x32xf32>
    %111 = arith.addf %108, %110 : vector<64x32xf32>
    %c0_29 = arith.constant 0 : index
    %c0_30 = arith.constant 0 : index
    %112 = vector.load %arg7[%c0_29, %c0_30] : memref<64x32xf32, #tpu.memory_space<vmem>>, vector<64x32xf32>
    tpu.vector_store %arg7[%c0_29, %c0_30], %111 {strides = array<i32>} : memref<64x32xf32, #tpu.memory_space<vmem>>, vector<64x32xf32>,
    return
  }
  func.func @transform_0(%arg0: i32) -> (i32, i32) {
    %c0_i32 = arith.constant 0 : i32
    %c0_i32_0 = arith.constant 0 : i32
    return %arg0, %c0_i32 : i32, i32
  }
  func.func @transform_1(%arg0: i32) -> (i32, i32) {
    %c0_i32 = arith.constant 0 : i32
    %c0_i32_0 = arith.constant 0 : i32
    %c0_i32_1 = arith.constant 0 : i32
    return %c0_i32, %c0_i32_0 : i32, i32
  }
  func.func @transform_2(%arg0: i32) -> (i32, i32) {
    %c0_i32 = arith.constant 0 : i32
    %c0_i32_0 = arith.constant 0 : i32
    %c0_i32_1 = arith.constant 0 : i32
    return %c0_i32, %c0_i32_0 : i32, i32
  }
  func.func @transform_3(%arg0: i32) -> (i32, i32, i32) {
    %c0_i32 = arith.constant 0 : i32
    %c0_i32_0 = arith.constant 0 : i32
    %c0_i32_1 = arith.constant 0 : i32
    %c0_i32_2 = arith.constant 0 : i32
    return %c0_i32, %c0_i32_0, %c0_i32_1 : i32, i32, i32
  }
  func.func @transform_4(%arg0: i32) -> (i32, i32) {
    %c0_i32 = arith.constant 0 : i32
    %c0_i32_0 = arith.constant 0 : i32
    %c0_i32_1 = arith.constant 0 : i32
    return %c0_i32, %c0_i32_0 : i32, i32
  }
  func.func @transform_5(%arg0: i32) -> (i32, i32) {
    %c0_i32 = arith.constant 0 : i32
    %c0_i32_0 = arith.constant 0 : i32
    %c0_i32_1 = arith.constant 0 : i32
    return %c0_i32, %c0_i32_0 : i32, i32
  }
  func.func @transform_6(%arg0: i32) -> (i32, i32) {
    %c0_i32 = arith.constant 0 : i32
    %c0_i32_0 = arith.constant 0 : i32
    return %arg0, %c0_i32 : i32, i32
  }
}

</mosaic_0001>

<llo_original>
// kernel: tpu_custom_call.1
$region0: #{tpu_custom_call.1}
  #allocation0 [shape = 'u32[]', space=smem, size = 0x4, offset = 0x4, fixed_abs, tag = 'smem constant byte address 0x4 - core index']
  #allocation1 [shape = 'u32[144,128]{1,0:T(1,128)}', space=vmem, size = 0x12000, scoped, tag = 'internal scratch']
  %s0 = inlined_call_operand.vmem [shape: bf16[128,32], index: 0, kind: input, shape index: {}]
  %s1 = inlined_call_operand.vmem [shape: bf16[32,96], index: 1, kind: input, shape index: {}]
  %s2 = inlined_call_operand.vmem [shape: f32[1,96], index: 2, kind: input, shape index: {}]
  %s3 = inlined_call_operand.vmem [shape: f32[4,16,16], index: 3, kind: input, shape index: {}]
  %s4 = inlined_call_operand.hbm [shape: bf16[32,32], index: 4, kind: input, shape index: {}]
  %s5 = inlined_call_operand.vmem [shape: f32[1,32], index: 5, kind: input, shape index: {}]
  %s6 = inlined_call_operand.vmem [shape: f32[128,32], index: 6, kind: output, shape index: {}]
  %s7 = sld [smem:[#allocation0]]
  $region61: #{tpu_custom_call.1} parent=0
    _
  %s9 = ssub.s32 1, %s7
  %s10 = scalar_select 0, %s9, %s7
  $region1: #{tpu_custom_call.1} parent=0
    #allocation2 [shape = 'u8[8192]{0}', space=vmem, size = 0x2000, scoped, tag = 'input window, operand 4, single buffered']
    #allocation3 [shape = 's32[2]{0}', space=sflag, size = 0x8, scoped, tag = 'scoped memory for tpu_custom_call.1']
    %11 = vsyncpa [#allocation3], 0
    loop: start=0, step=1, limit=4
    $region2: #{tpu_custom_call.1} parent=1 // loop_pre_header
      _
    $region3: #{tpu_custom_call.1} parent=1 // loop_header
      %s13 = sphi 0, %s17
      %p14 = scmp.ge.s32.totalorder %s13, 4
      %s23 = sphi 0, %s25
      %s26 = sphi 0, %s23
      %s27 = sphi 0, %s26
      %s43 = sphi 0, %s27
      %s47 = sphi 0, %s47
      %s49 = sphi 0, %s47
      %s50 = sphi 0, %s49
      %s64 = sphi 0, %s50
      %s68 = sphi 0, %s68
      %s70 = sphi 0, %s68
      %s71 = sphi 0, %s70
      %s85 = sphi 0, %s71
      %s89 = sphi 0, %s89
      %s91 = sphi 0, %s89
      %s92 = sphi 0, %s91
      %s106 = sphi 0, %s92
      %s110 = sphi 0, %s110
      %s112 = sphi 0, %s110
      %s113 = sphi 0, %s112
      %s127 = sphi 0, %s113
      %s131 = sphi 0, %s131
      %s133 = sphi 0, %s131
      %s134 = sphi 0, %s133
      %s148 = sphi 0, %s134
      %s154 = sphi 0, %s156
      %s157 = sphi 0, %s154
      %s158 = sphi 0, %s157
      %s174 = sphi 0, %s158
    $region4: #{tpu_custom_call.1} parent=1 // loop_header_branch
      %16 = sbr.rel (%p14) target = $region8
    $region5: #{tpu_custom_call.1} parent=1 // loop_body
      %s18 = ssub.s32 %s13, 1
      %s19 = ssub.s32 %s13, 2
      %s20 = sadd.s32 %s13, 1
      %s21 = ssub.s32 %s13, %s20
      %p22 = scmp.eq.s32.totalorder %s21, 0
      %s24 = sadd.s32 %s23, 1
      %s25 = scalar_select %p22, %s23, %s24
      %p28 = pneg %p22
      %p29 = scmp.eq.s32.totalorder %s13, 1
      %p30 = por %p28, %p29
      %p31 = scmp.ne.s32.totalorder %s23, %s26
      %p32 = scmp.eq.s32.totalorder %s13, 0
      %p33 = por %p31, %p32
      %p34 = scmp.ne.s32.totalorder %s23, %s26
      %p35 = scmp.eq.s32.totalorder %s18, 1
      %p36 = por %p34, %p35
      %p37 = scmp.ne.s32.totalorder %s26, %s27
      %p38 = scmp.eq.s32.totalorder %s18, 0
      %p39 = por %p37, %p38
      %p40 = scmp.ne.s32.totalorder %s26, %s27
      %p41 = scmp.eq.s32.totalorder %s19, 1
      %p42 = por %p40, %p41
      %p44 = scmp.ne.s32.totalorder %s27, %s43
      %p45 = scmp.eq.s32.totalorder %s19, 0
      %p46 = por %p44, %p45
      %s48 = sadd.s32 %s47, 1
      %p51 = scmp.eq.s32.totalorder %s13, 1
      %p52 = scmp.ne.s32.totalorder %s47, %s49
      %p53 = scmp.eq.s32.totalorder %s13, 0
      %p54 = por %p52, %p53
      %p55 = scmp.ne.s32.totalorder %s47, %s49
      %p56 = scmp.eq.s32.totalorder %s18, 1
      %p57 = por %p55, %p56
      %p58 = scmp.ne.s32.totalorder %s49, %s50
      %p59 = scmp.eq.s32.totalorder %s18, 0
      %p60 = por %p58, %p59
      %p61 = scmp.ne.s32.totalorder %s49, %s50
      %p62 = scmp.eq.s32.totalorder %s19, 1
      %p63 = por %p61, %p62
      %p65 = scmp.ne.s32.totalorder %s50, %s64
      %p66 = scmp.eq.s32.totalorder %s19, 0
      %p67 = por %p65, %p66
      %s69 = sadd.s32 %s68, 1
      %p72 = scmp.eq.s32.totalorder %s13, 1
      %p73 = scmp.ne.s32.totalorder %s68, %s70
      %p74 = scmp.eq.s32.totalorder %s13, 0
      %p75 = por %p73, %p74
      %p76 = scmp.ne.s32.totalorder %s68, %s70
      %p77 = scmp.eq.s32.totalorder %s18, 1
      %p78 = por %p76, %p77
      %p79 = scmp.ne.s32.totalorder %s70, %s71
      %p80 = scmp.eq.s32.totalorder %s18, 0
      %p81 = por %p79, %p80
      %p82 = scmp.ne.s32.totalorder %s70, %s71
      %p83 = scmp.eq.s32.totalorder %s19, 1
      %p84 = por %p82, %p83
      %p86 = scmp.ne.s32.totalorder %s71, %s85
      %p87 = scmp.eq.s32.totalorder %s19, 0
      %p88 = por %p86, %p87
      %s90 = sadd.s32 %s89, 1
      %p93 = scmp.eq.s32.totalorder %s13, 1
      %p94 = scmp.ne.s32.totalorder %s89, %s91
      %p95 = scmp.eq.s32.totalorder %s13, 0
      %p96 = por %p94, %p95
      %p97 = scmp.ne.s32.totalorder %s89, %s91
      %p98 = scmp.eq.s32.totalorder %s18, 1
      %p99 = por %p97, %p98
      %p100 = scmp.ne.s32.totalorder %s91, %s92
      %p101 = scmp.eq.s32.totalorder %s18, 0
      %p102 = por %p100, %p101
      %p103 = scmp.ne.s32.totalorder %s91, %s92
      %p104 = scmp.eq.s32.totalorder %s19, 1
      %p105 = por %p103, %p104
      %p107 = scmp.ne.s32.totalorder %s92, %s106
      %p108 = scmp.eq.s32.totalorder %s19, 0
      %p109 = por %p107, %p108
      %s111 = sadd.s32 %s110, 1
      %p114 = scmp.eq.s32.totalorder %s13, 1
      %p115 = scmp.ne.s32.totalorder %s110, %s112
      %p116 = scmp.eq.s32.totalorder %s13, 0
      %p117 = por %p115, %p116
      %p118 = scmp.ne.s32.totalorder %s110, %s112
      %p119 = scmp.eq.s32.totalorder %s18, 1
      %p120 = por %p118, %p119
      %p121 = scmp.ne.s32.totalorder %s112, %s113
      %p122 = scmp.eq.s32.totalorder %s18, 0
      %p123 = por %p121, %p122
      %p124 = scmp.ne.s32.totalorder %s112, %s113
      %p125 = scmp.eq.s32.totalorder %s19, 1
      %p126 = por %p124, %p125
      %p128 = scmp.ne.s32.totalorder %s113, %s127
      %p129 = scmp.eq.s32.totalorder %s19, 0
      %p130 = por %p128, %p129
      %s132 = sadd.s32 %s131, 1
      %p135 = scmp.eq.s32.totalorder %s13, 1
      %p136 = scmp.ne.s32.totalorder %s131, %s133
      %p137 = scmp.eq.s32.totalorder %s13, 0
      %p138 = por %p136, %p137
      %p139 = scmp.ne.s32.totalorder %s131, %s133
      %p140 = scmp.eq.s32.totalorder %s18, 1
      %p141 = por %p139, %p140
      %p142 = scmp.ne.s32.totalorder %s133, %s134
      %p143 = scmp.eq.s32.totalorder %s18, 0
      %p144 = por %p142, %p143
      %p145 = scmp.ne.s32.totalorder %s133, %s134
      %p146 = scmp.eq.s32.totalorder %s19, 1
      %p147 = por %p145, %p146
      %p149 = scmp.ne.s32.totalorder %s134, %s148
      %p150 = scmp.eq.s32.totalorder %s19, 0
      %p151 = por %p149, %p150
      %s152 = ssub.s32 %s13, %s20
      %p153 = scmp.eq.s32.totalorder %s152, 0
      %s155 = sadd.s32 %s154, 1
      %s156 = scalar_select %p153, %s154, %s155
      %p159 = pneg %p153
      %p160 = scmp.eq.s32.totalorder %s13, 1
      %p161 = por %p159, %p160
      %p162 = scmp.ne.s32.totalorder %s154, %s157
      %p163 = scmp.eq.s32.totalorder %s13, 0
      %p164 = por %p162, %p163
      %p165 = scmp.ne.s32.totalorder %s154, %s157
      %p166 = scmp.eq.s32.totalorder %s18, 1
      %p167 = por %p165, %p166
      %p168 = scmp.ne.s32.totalorder %s157, %s158
      %p169 = scmp.eq.s32.totalorder %s18, 0
      %p170 = por %p168, %p169
      %p171 = scmp.ne.s32.totalorder %s157, %s158
      %p172 = scmp.eq.s32.totalorder %s19, 1
      %p173 = por %p171, %p172
      %p175 = scmp.ne.s32.totalorder %s158, %s174
      %p176 = scmp.eq.s32.totalorder %s19, 0
      %p177 = por %p175, %p176
      %p178 = scmp.le.s32.totalorder 1, %s13
      %p179 = scmp.lt.s32.totalorder %s13, 3
      %p180 = pnand %p178, %p179
      %p181 = pneg %p180
      // Predicated region
      $region9: #{tpu_custom_call.1} parent=5 // pred_check
        _
      $region10: #{tpu_custom_call.1} parent=5 // pred_check_branch
        %183 = sbr.rel (%p180) target = $region12
      $region11: #{tpu_custom_call.1} parent=5 // pred_region
        %s184 = ssub.s32 %s13, 1
        // Predicated region
        $region13: #{tpu_custom_call.1} parent=11 // pred_check
          %p185 = pneg %p60
        $region14: #{tpu_custom_call.1} parent=11 // pred_check_branch
          %187 = sbr.rel (%p185) target = $region16
        $region15: #{tpu_custom_call.1} parent=11 // pred_region
          _
        $region16: #{tpu_custom_call.1} parent=11 // pred_fallthru
          _
        // Predicated region
        $region17: #{tpu_custom_call.1} parent=11 // pred_check
          %p188 = pneg %p81
        $region18: #{tpu_custom_call.1} parent=11 // pred_check_branch
          %190 = sbr.rel (%p188) target = $region20
        $region19: #{tpu_custom_call.1} parent=11 // pred_region
          _
        $region20: #{tpu_custom_call.1} parent=11 // pred_fallthru
          _
        // Predicated region
        $region21: #{tpu_custom_call.1} parent=11 // pred_check
          %p191 = pneg %p102
        $region22: #{tpu_custom_call.1} parent=11 // pred_check_branch
          %193 = sbr.rel (%p191) target = $region24
        $region23: #{tpu_custom_call.1} parent=11 // pred_region
          _
        $region24: #{tpu_custom_call.1} parent=11 // pred_fallthru
          _
        // Predicated region
        $region25: #{tpu_custom_call.1} parent=11 // pred_check
          %p194 = pneg %p123
        $region26: #{tpu_custom_call.1} parent=11 // pred_check_branch
          %196 = sbr.rel (%p194) target = $region28
        $region27: #{tpu_custom_call.1} parent=11 // pred_region
          %s198 = ssub.s32 256, 256
          %199 = vsyncadd [#allocation3], %s198
          %s200 = sshll.u32 [#allocation2], 4
          %s201 = int_to_ptr.vmem [resolvable:$true] %s200
          %206 = dma.hbm_to_vmem [thread:$0]  %s4, 256, %s201, [#allocation3], 64, 64, 4
        $region28: #{tpu_custom_call.1} parent=11 // pred_fallthru
          _
        // Predicated region
        $region29: #{tpu_custom_call.1} parent=11 // pred_check
          %p207 = pneg %p144
        $region30: #{tpu_custom_call.1} parent=11 // pred_check_branch
          %209 = sbr.rel (%p207) target = $region32
        $region31: #{tpu_custom_call.1} parent=11 // pred_region
          _
        $region32: #{tpu_custom_call.1} parent=11 // pred_fallthru
          _
      $region12: #{tpu_custom_call.1} parent=5 // pred_fallthru
        _
      %p210 = scmp.lt.s32.totalorder %s13, 2
      // Predicated region
      $region33: #{tpu_custom_call.1} parent=5 // pred_check
        %p211 = pneg %p210
      $region34: #{tpu_custom_call.1} parent=5 // pred_check_branch
        %213 = sbr.rel (%p211) target = $region36
      $region35: #{tpu_custom_call.1} parent=5 // pred_region
        // Predicated region
        $region37: #{tpu_custom_call.1} parent=35 // pred_check
          %p214 = pneg %p33
        $region38: #{tpu_custom_call.1} parent=35 // pred_check_branch
          %216 = sbr.rel (%p214) target = $region40
        $region39: #{tpu_custom_call.1} parent=35 // pred_region
          %s217 = smul.u32 8, %s13
          %p218 = scmp.lt.s32.totalorder %s217, 15
          %s219 = scalar_select %p218, %s217, 15
          %s220 = smul.addr %s219, 4
          %s221 = scalar_lea.vmem %s0, %s220
          %s222 = smul.u32 8, %s13
        $region40: #{tpu_custom_call.1} parent=35 // pred_fallthru
          _
      $region36: #{tpu_custom_call.1} parent=5 // pred_fallthru
        _
      %p223 = scmp.le.s32.totalorder 1, %s13
      %p224 = scmp.lt.s32.totalorder %s13, 3
      %p225 = pnand %p223, %p224
      %p226 = pneg %p225
      // Predicated region
      $region41: #{tpu_custom_call.1} parent=5 // pred_check
        _
      $region42: #{tpu_custom_call.1} parent=5 // pred_check_branch
        %228 = sbr.rel (%p225) target = $region44
      $region43: #{tpu_custom_call.1} parent=5 // pred_region
        %s229 = ssub.s32 %s13, 1
        // Predicated region
        $region45: #{tpu_custom_call.1} parent=43 // pred_check
          %p230 = pneg %p123
        $region46: #{tpu_custom_call.1} parent=43 // pred_check_branch
          %232 = sbr.rel (%p230) target = $region48
        $region47: #{tpu_custom_call.1} parent=43 // pred_region
          %233 = dma.done [#allocation3], 256
        $region48: #{tpu_custom_call.1} parent=43 // pred_fallthru
          _
        %s234 = smul.u32 8, %s18
        %p235 = scmp.lt.s32.totalorder %s234, 15
        %s236 = scalar_select %p235, %s234, 15
        %s237 = smul.addr %s236, 4
        %s238 = scalar_lea.vmem %s0, %s237
        %p239 = pneg %p39
        %p240 = pneg %p36
        %p241 = pneg %p60
        %p242 = pneg %p57
        %p243 = pneg %p81
        %p244 = pneg %p78
        %p245 = pneg %p102
        %p246 = pneg %p99
        %p247 = pneg %p123
        %p248 = pneg %p120
        %p249 = pneg %p144
        %p250 = pneg %p141
        %p251 = pneg %p170
        %p252 = pneg %p167
        %s253 = smul.u32 8, %s18
        %p254 = scmp.lt.s32.totalorder %s253, 15
        %s255 = scalar_select %p254, %s253, 15
        %s256 = smul.addr %s255, 8
        %s257 = scalar_lea.vmem %s6, %s256
        %s258 = smul.u32 8, %s18
        %p259 = scmp.lt.s32.totalorder %s258, 15
        %s260 = scalar_select %p259, %s258, 15
        %s261 = smul.addr %s260, 4
        %s262 = scalar_lea.vmem %s0, %s261
        %s263 = smul.u32 8, %s18
        %s264 = smul.u32 8, %s18
        %p265 = scmp.lt.s32.totalorder %s264, 15
        %s266 = scalar_select %p265, %s264, 15
        %s267 = smul.addr %s266, 8
        %s268 = scalar_lea.vmem %s6, %s267
        %s269 = smul.u32 8, %s18
        %v271 = vld [vmem:[%s262] sm:$0xf]
        %v272 = vld [vmem:[%s262 + $0x4] sm:$0xf]
        %v273 = vld [vmem:[%s262 + $0x8] sm:$0xf]
        %v274 = vld [vmem:[%s262 + $0xc] sm:$0xf]
        %v275 = vld [vmem:[%s262 + $0x10] sm:$0xf]
        %v276 = vld [vmem:[%s262 + $0x14] sm:$0xf]
        %v277 = vld [vmem:[%s262 + $0x18] sm:$0xf]
        %v278 = vld [vmem:[%s262 + $0x1c] sm:$0xf]
        %v279 = vld [vmem:[%s1] sm:$0xf]
        %v280 = vld [vmem:[%s1 + $0x4] sm:$0xf]
        %v281 = vld [vmem:[%s1 + $0x8] sm:$0xf]
        %v282 = vld [vmem:[%s1 + $0xc] sm:$0xf]
        %v283 = vld [vmem:[%s2] sm:$0x1]
        %v285 = vlaneseq
        %v286 = vshrl.u32 %v285, 7
        %v287 = vsub.s32 0, %v286
        %v288 = vrot.slane %v283, %v287
        %v298 = vunpack.c.l.b16 %v271
        %v299 = vunpack.c.l.b16 %v272
        %v300 = vunpack.c.l.b16 %v273
        %v301 = vunpack.c.l.b16 %v274
        %v302 = vunpack.c.l.b16 %v275
        %v303 = vunpack.c.l.b16 %v276
        %v304 = vunpack.c.l.b16 %v277
        %v305 = vunpack.c.l.b16 %v278
        %v306 = vpack.c.b16 %v299, %v298
        %v307 = vpack.c.b16 %v301, %v300
        %v308 = vpack.c.b16 %v303, %v302
        %v309 = vpack.c.b16 %v305, %v304
        %v314 = vunpack.c.l.b16 %v279
        %v315 = vunpack.c.l.b16 %v280
        %v316 = vunpack.c.l.b16 %v281
        %v317 = vunpack.c.l.b16 %v282
        %v318 = vpack.c.b16 %v315, %v314
        %v319 = vpack.c.b16 %v317, %v316
        %vm322 = vcmask 261120
        %v324 = vsel %vm322, %v306, 0
        %v327 = vsel %vm322, %v307, 0
        %v330 = vsel %vm322, %v308, 0
        %v333 = vsel %vm322, %v309, 0
        %335 = vmatprep.subr.bf16.mxu0 0
        %336 = vmatpush1.bf16.msra.mxu0 %v318
        %337 = vmatprep.subr.bf16.mxu0 0
        %338 = vmatpush1.bf16.msra.mxu0 %v319
        %339 = vmatprep.subr.bf16.mxu0 0
        %340 = vmatpush1.bf16.msra.mxu0 0
        %341 = vmatprep.subr.bf16.mxu0 0
        %342 = vmatpush1.bf16.msra.mxu0 0
        %343 = vmatprep.subr.bf16.mxu0 0
        %344 = vmatpush1.bf16.msra.mxu0 0
        %345 = vmatprep.subr.bf16.mxu0 0
        %346 = vmatpush1.bf16.msra.mxu0 0
        %347 = vmatprep.subr.bf16.mxu0 0
        %348 = vmatpush1.bf16.msra.mxu0 0
        %349 = vmatprep.subr.bf16.mxu0 0
        %350 = vmatpush1.bf16.msra.mxu0 0
        %351 = vmatprep.subr.bf16.mxu0 0
        %352 = vmatpush1.bf16.msra.mxu0 0
        %353 = vmatprep.subr.bf16.mxu0 0
        %354 = vmatpush1.bf16.msra.mxu0 0
        %355 = vmatprep.subr.bf16.mxu0 0
        %356 = vmatpush1.bf16.msra.mxu0 0
        %357 = vmatprep.subr.bf16.mxu0 0
        %358 = vmatpush1.bf16.msra.mxu0 0
        %359 = vmatprep.subr.bf16.mxu0 0
        %360 = vmatpush1.bf16.msra.mxu0 0
        %361 = vmatprep.subr.bf16.mxu0 0
        %362 = vmatpush1.bf16.msra.mxu0 0
        %363 = vmatprep.subr.bf16.mxu0 0
        %364 = vmatpush1.bf16.msra.mxu0 0
        %365 = vmatprep.subr.bf16.mxu0 0
        %366 = vmatpush1.bf16.msra.mxu0 0
        %367 = vmatprep.mubr.bf16.mxu0 0
        %368 = vmatmul.mubr.bf16.gmra.mrb[0].mxu0 %v324
        %v369 = vpop.f32.mrb[0].mxu0
        %v370 = vadd.f32 %v288, %v369
        %v371 = vpop.f32.mrb[0].mxu0
        %v372 = vpop.f32.mrb[0].mxu0
        %v373 = vadd.f32 %v288, %v372
        %v374 = vpop.f32.mrb[0].mxu0
        %375 = vmatprep.mubr.bf16.mxu0 0
        %376 = vmatmul.mubr.bf16.gmra.mrb[0].mxu0 %v327
        %v377 = vpop.f32.mrb[0].mxu0
        %v378 = vadd.f32 %v288, %v377
        %v379 = vpop.f32.mrb[0].mxu0
        %v380 = vpop.f32.mrb[0].mxu0
        %v381 = vadd.f32 %v288, %v380
        %v382 = vpop.f32.mrb[0].mxu0
        %383 = vmatprep.mubr.bf16.mxu0 0
        %384 = vmatmul.mubr.bf16.gmra.mrb[0].mxu0 %v330
        %v385 = vpop.f32.mrb[0].mxu0
        %v386 = vadd.f32 %v288, %v385
        %v387 = vpop.f32.mrb[0].mxu0
        %v388 = vpop.f32.mrb[0].mxu0
        %v389 = vadd.f32 %v288, %v388
        %v390 = vpop.f32.mrb[0].mxu0
        %391 = vmatprep.mubr.bf16.mxu0 0
        %392 = vmatmul.mubr.bf16.gmra.mrb[0].mxu0 %v333
        %v393 = vpop.f32.mrb[0].mxu0
        %v394 = vadd.f32 %v288, %v393
        %v395 = vpop.f32.mrb[0].mxu0
        %v396 = vpop.f32.mrb[0].mxu0
        %v397 = vadd.f32 %v288, %v396
        %v398 = vpop.f32.mrb[0].mxu0
        %399 = vdwg.mxu0
        %v400 = vpack.c.bf16 %v373, %v370
        %v401 = vpack.c.bf16 %v381, %v378
        %v402 = vpack.c.bf16 %v389, %v386
        %v403 = vpack.c.bf16 %v397, %v394
        %v404 = vld [vmem:[%s3] sm:$0xff]
        %v405 = vld [vmem:[%s3 + $0x8] sm:$0xff]
        %v406 = vld [vmem:[%s3 + $0x10] sm:$0xff]
        %v407 = vld [vmem:[%s3 + $0x18] sm:$0xff]
        %v408 = vld [vmem:[%s3 + $0x20] sm:$0xff]
        %v409 = vld [vmem:[%s3 + $0x28] sm:$0xff]
        %v410 = vld [vmem:[%s3 + $0x30] sm:$0xff]
        %v411 = vld [vmem:[%s3 + $0x38] sm:$0xff]
        %413 = vrot.lane.b32.xlu0 %v400, 96
        %v414 = vpop.permute.xlu0 %413
        %vm415 = vcmask 64512
        %v417 = vsel %vm415, %v400, 0
        %v420 = vsel %vm415, %v414, 0
        %422 = vmatprep.subr.bf16.mxu0 0
        %423 = vmatpush1.bf16.xpose.msra.mxu0 %v420
        %424 = vmatprep.subr.bf16.mxu0 0
        %425 = vmatpush1.bf16.xpose.msra.mxu0 0
        %426 = vmatprep.subr.bf16.mxu0 0
        %427 = vmatpush1.bf16.xpose.msra.mxu0 0
        %428 = vmatprep.subr.bf16.mxu0 0
        %429 = vmatpush1.bf16.xpose.msra.mxu0 0
        %430 = vmatprep.subr.bf16.mxu0 0
        %431 = vmatpush1.bf16.xpose.msra.mxu0 0
        %432 = vmatprep.subr.bf16.mxu0 0
        %433 = vmatpush1.bf16.xpose.msra.mxu0 0
        %434 = vmatprep.subr.bf16.mxu0 0
        %435 = vmatpush1.bf16.xpose.msra.mxu0 0
        %436 = vmatprep.subr.bf16.mxu0 0
        %437 = vmatpush1.bf16.xpose.msra.mxu0 0
        %438 = vmatprep.subr.bf16.mxu0 0
        %439 = vmatpush1.bf16.xpose.msra.mxu0 0
        %440 = vmatprep.subr.bf16.mxu0 0
        %441 = vmatpush1.bf16.xpose.msra.mxu0 0
        %442 = vmatprep.subr.bf16.mxu0 0
        %443 = vmatpush1.bf16.xpose.msra.mxu0 0
        %444 = vmatprep.subr.bf16.mxu0 0
        %445 = vmatpush1.bf16.xpose.msra.mxu0 0
        %446 = vmatprep.subr.bf16.mxu0 0
        %447 = vmatpush1.bf16.xpose.msra.mxu0 0
        %448 = vmatprep.subr.bf16.mxu0 0
        %449 = vmatpush1.bf16.xpose.msra.mxu0 0
        %450 = vmatprep.subr.bf16.mxu0 0
        %451 = vmatpush1.bf16.xpose.msra.mxu0 0
        %452 = vmatprep.subr.bf16.mxu0 0
        %453 = vmatpush1.bf16.xpose.msra.mxu0 0
        %454 = vmatprep.mubr.bf16.mxu0 0
        %455 = vmatmul.mubr.bf16.gmra.mrb[0].mxu0 %v417
        %v456 = vpop.f32.mrb[0].mxu0
        %v457 = vadd.f32 %v404, %v456
        %v458 = vpop.f32.mrb[0].mxu0
        %v459 = vpop.f32.mrb[0].mxu0
        %v460 = vadd.f32 %v405, %v459
        %v461 = vpop.f32.mrb[0].mxu0
        %462 = vdwg.mxu0
        %464 = vrot.lane.b32.xlu0 %v401, 96
        %v465 = vpop.permute.xlu0 %464
        %v467 = vsel %vm415, %v401, 0
        %v470 = vsel %vm415, %v465, 0
        %472 = vmatprep.subr.bf16.mxu0 0
        %473 = vmatpush1.bf16.xpose.msra.mxu0 %v470
        %474 = vmatprep.subr.bf16.mxu0 0
        %475 = vmatpush1.bf16.xpose.msra.mxu0 0
        %476 = vmatprep.subr.bf16.mxu0 0
        %477 = vmatpush1.bf16.xpose.msra.mxu0 0
        %478 = vmatprep.subr.bf16.mxu0 0
        %479 = vmatpush1.bf16.xpose.msra.mxu0 0
        %480 = vmatprep.subr.bf16.mxu0 0
        %481 = vmatpush1.bf16.xpose.msra.mxu0 0
        %482 = vmatprep.subr.bf16.mxu0 0
        %483 = vmatpush1.bf16.xpose.msra.mxu0 0
        %484 = vmatprep.subr.bf16.mxu0 0
        %485 = vmatpush1.bf16.xpose.msra.mxu0 0
        %486 = vmatprep.subr.bf16.mxu0 0
        %487 = vmatpush1.bf16.xpose.msra.mxu0 0
        %488 = vmatprep.subr.bf16.mxu0 0
        %489 = vmatpush1.bf16.xpose.msra.mxu0 0
        %490 = vmatprep.subr.bf16.mxu0 0
        %491 = vmatpush1.bf16.xpose.msra.mxu0 0
        %492 = vmatprep.subr.bf16.mxu0 0
        %493 = vmatpush1.bf16.xpose.msra.mxu0 0
        %494 = vmatprep.subr.bf16.mxu0 0
        %495 = vmatpush1.bf16.xpose.msra.mxu0 0
        %496 = vmatprep.subr.bf16.mxu0 0
        %497 = vmatpush1.bf16.xpose.msra.mxu0 0
        %498 = vmatprep.subr.bf16.mxu0 0
        %499 = vmatpush1.bf16.xpose.msra.mxu0 0
        %500 = vmatprep.subr.bf16.mxu0 0
        %501 = vmatpush1.bf16.xpose.msra.mxu0 0
        %502 = vmatprep.subr.bf16.mxu0 0
        %503 = vmatpush1.bf16.xpose.msra.mxu0 0
        %504 = vmatprep.mubr.bf16.mxu0 0
        %505 = vmatmul.mubr.bf16.gmra.mrb[0].mxu0 %v467
        %v506 = vpop.f32.mrb[0].mxu0
        %v507 = vadd.f32 %v404, %v506
        %v508 = vpop.f32.mrb[0].mxu0
        %v509 = vpop.f32.mrb[0].mxu0
        %v510 = vadd.f32 %v405, %v509
        %v511 = vpop.f32.mrb[0].mxu0
        %512 = vdwg.mxu0
        %514 = vrot.lane.b32.xlu0 %v402, 96
        %v515 = vpop.permute.xlu0 %514
        %v517 = vsel %vm415, %v402, 0
        %v520 = vsel %vm415, %v515, 0
        %522 = vmatprep.subr.bf16.mxu0 0
        %523 = vmatpush1.bf16.xpose.msra.mxu0 %v520
        %524 = vmatprep.subr.bf16.mxu0 0
        %525 = vmatpush1.bf16.xpose.msra.mxu0 0
        %526 = vmatprep.subr.bf16.mxu0 0
        %527 = vmatpush1.bf16.xpose.msra.mxu0 0
        %528 = vmatprep.subr.bf16.mxu0 0
        %529 = vmatpush1.bf16.xpose.msra.mxu0 0
        %530 = vmatprep.subr.bf16.mxu0 0
        %531 = vmatpush1.bf16.xpose.msra.mxu0 0
        %532 = vmatprep.subr.bf16.mxu0 0
        %533 = vmatpush1.bf16.xpose.msra.mxu0 0
        %534 = vmatprep.subr.bf16.mxu0 0
        %535 = vmatpush1.bf16.xpose.msra.mxu0 0
        %536 = vmatprep.subr.bf16.mxu0 0
        %537 = vmatpush1.bf16.xpose.msra.mxu0 0
        %538 = vmatprep.subr.bf16.mxu0 0
        %539 = vmatpush1.bf16.xpose.msra.mxu0 0
        %540 = vmatprep.subr.bf16.mxu0 0
        %541 = vmatpush1.bf16.xpose.msra.mxu0 0
        %542 = vmatprep.subr.bf16.mxu0 0
        %543 = vmatpush1.bf16.xpose.msra.mxu0 0
        %544 = vmatprep.subr.bf16.mxu0 0
        %545 = vmatpush1.bf16.xpose.msra.mxu0 0
        %546 = vmatprep.subr.bf16.mxu0 0
        %547 = vmatpush1.bf16.xpose.msra.mxu0 0
        %548 = vmatprep.subr.bf16.mxu0 0
        %549 = vmatpush1.bf16.xpose.msra.mxu0 0
        %550 = vmatprep.subr.bf16.mxu0 0
        %551 = vmatpush1.bf16.xpose.msra.mxu0 0
        %552 = vmatprep.subr.bf16.mxu0 0
        %553 = vmatpush1.bf16.xpose.msra.mxu0 0
        %554 = vmatprep.mubr.bf16.mxu0 0
        %555 = vmatmul.mubr.bf16.gmra.mrb[0].mxu0 %v517
        %v556 = vpop.f32.mrb[0].mxu0
        %v557 = vadd.f32 %v404, %v556
        %v558 = vpop.f32.mrb[0].mxu0
        %v559 = vpop.f32.mrb[0].mxu0
        %v560 = vadd.f32 %v405, %v559
        %v561 = vpop.f32.mrb[0].mxu0
        %562 = vdwg.mxu0
        %564 = vrot.lane.b32.xlu0 %v403, 96
        %v565 = vpop.permute.xlu0 %564
        %v567 = vsel %vm415, %v403, 0
        %v570 = vsel %vm415, %v565, 0
        %572 = vmatprep.subr.bf16.mxu0 0
        %573 = vmatpush1.bf16.xpose.msra.mxu0 %v570
        %574 = vmatprep.subr.bf16.mxu0 0
        %575 = vmatpush1.bf16.xpose.msra.mxu0 0
        %576 = vmatprep.subr.bf16.mxu0 0
        %577 = vmatpush1.bf16.xpose.msra.mxu0 0
        %578 = vmatprep.subr.bf16.mxu0 0
        %579 = vmatpush1.bf16.xpose.msra.mxu0 0
        %580 = vmatprep.subr.bf16.mxu0 0
        %581 = vmatpush1.bf16.xpose.msra.mxu0 0
        %582 = vmatprep.subr.bf16.mxu0 0
        %583 = vmatpush1.bf16.xpose.msra.mxu0 0
        %584 = vmatprep.subr.bf16.mxu0 0
        %585 = vmatpush1.bf16.xpose.msra.mxu0 0
        %586 = vmatprep.subr.bf16.mxu0 0
        %587 = vmatpush1.bf16.xpose.msra.mxu0 0
        %588 = vmatprep.subr.bf16.mxu0 0
        %589 = vmatpush1.bf16.xpose.msra.mxu0 0
        %590 = vmatprep.subr.bf16.mxu0 0
        %591 = vmatpush1.bf16.xpose.msra.mxu0 0
        %592 = vmatprep.subr.bf16.mxu0 0
        %593 = vmatpush1.bf16.xpose.msra.mxu0 0
        %594 = vmatprep.subr.bf16.mxu0 0
        %595 = vmatpush1.bf16.xpose.msra.mxu0 0
        %596 = vmatprep.subr.bf16.mxu0 0
        %597 = vmatpush1.bf16.xpose.msra.mxu0 0
        %598 = vmatprep.subr.bf16.mxu0 0
        %599 = vmatpush1.bf16.xpose.msra.mxu0 0
        %600 = vmatprep.subr.bf16.mxu0 0
        %601 = vmatpush1.bf16.xpose.msra.mxu0 0
        %602 = vmatprep.subr.bf16.mxu0 0
        %603 = vmatpush1.bf16.xpose.msra.mxu0 0
        %604 = vmatprep.mubr.bf16.mxu0 0
        %605 = vmatmul.mubr.bf16.gmra.mrb[0].mxu0 %v567
        %v606 = vpop.f32.mrb[0].mxu0
        %v607 = vadd.f32 %v404, %v606
        %v608 = vpop.f32.mrb[0].mxu0
        %v609 = vpop.f32.mrb[0].mxu0
        %v610 = vadd.f32 %v405, %v609
        %v611 = vpop.f32.mrb[0].mxu0
        %612 = vdwg.mxu0
        %vm613 = vcmask 130048
        %v614 = vsel %vm613, %v457, -inf
        %615 = vmax.xlane.f32.xlu0 %v614
        %v616 = vpop.xlane.xlu0 %615
        %v617 = vsel %vm613, %v460, -inf
        %618 = vmax.xlane.f32.xlu0 %v617
        %v619 = vpop.xlane.xlu0 %618
        %v620 = vsel %vm613, %v507, -inf
        %621 = vmax.xlane.f32.xlu0 %v620
        %v622 = vpop.xlane.xlu0 %621
        %v623 = vsel %vm613, %v510, -inf
        %624 = vmax.xlane.f32.xlu0 %v623
        %v625 = vpop.xlane.xlu0 %624
        %v626 = vsel %vm613, %v557, -inf
        %627 = vmax.xlane.f32.xlu0 %v626
        %v628 = vpop.xlane.xlu0 %627
        %v629 = vsel %vm613, %v560, -inf
        %630 = vmax.xlane.f32.xlu0 %v629
        %v631 = vpop.xlane.xlu0 %630
        %v632 = vsel %vm613, %v607, -inf
        %633 = vmax.xlane.f32.xlu0 %v632
        %v634 = vpop.xlane.xlu0 %633
        %v635 = vsel %vm613, %v610, -inf
        %636 = vmax.xlane.f32.xlu0 %v635
        %v637 = vpop.xlane.xlu0 %636
        %v638 = vsub.f32 %v457, %v616
        %v639 = vsub.f32 %v460, %v619
        %v640 = vsub.f32 %v507, %v622
        %v641 = vsub.f32 %v510, %v625
        %v642 = vsub.f32 %v557, %v628
        %v643 = vsub.f32 %v560, %v631
        %v644 = vsub.f32 %v607, %v634
        %v645 = vsub.f32 %v610, %v637
        %v646 = vmul.f32 %v638, 1.442695
        %v647 = vpow.pop %v646
        %v648 = vmul.f32 %v639, 1.442695
        %v649 = vpow.pop %v648
        %v650 = vmul.f32 %v640, 1.442695
        %v651 = vpow.pop %v650
        %v652 = vmul.f32 %v641, 1.442695
        %v653 = vpow.pop %v652
        %v654 = vmul.f32 %v642, 1.442695
        %v655 = vpow.pop %v654
        %v656 = vmul.f32 %v643, 1.442695
        %v657 = vpow.pop %v656
        %v658 = vmul.f32 %v644, 1.442695
        %v659 = vpow.pop %v658
        %v660 = vmul.f32 %v645, 1.442695
        %v661 = vpow.pop %v660
        %v662 = vsel %vm613, %v647, 0.0
        %663 = vadd.xlane.f32.xlu0 %v662
        %v664 = vpop.xlane.xlu0 %663
        %v665 = vsel %vm613, %v649, 0.0
        %666 = vadd.xlane.f32.xlu0 %v665
        %v667 = vpop.xlane.xlu0 %666
        %v668 = vsel %vm613, %v651, 0.0
        %669 = vadd.xlane.f32.xlu0 %v668
        %v670 = vpop.xlane.xlu0 %669
        %v671 = vsel %vm613, %v653, 0.0
        %672 = vadd.xlane.f32.xlu0 %v671
        %v673 = vpop.xlane.xlu0 %672
        %v674 = vsel %vm613, %v655, 0.0
        %675 = vadd.xlane.f32.xlu0 %v674
        %v676 = vpop.xlane.xlu0 %675
        %v677 = vsel %vm613, %v657, 0.0
        %678 = vadd.xlane.f32.xlu0 %v677
        %v679 = vpop.xlane.xlu0 %678
        %v680 = vsel %vm613, %v659, 0.0
        %681 = vadd.xlane.f32.xlu0 %v680
        %v682 = vpop.xlane.xlu0 %681
        %v683 = vsel %vm613, %v661, 0.0
        %684 = vadd.xlane.f32.xlu0 %v683
        %v685 = vpop.xlane.xlu0 %684
        %v686 = vrcp.pop %v664
        %v687 = vrcp.pop %v667
        %v688 = vrcp.pop %v670
        %v689 = vrcp.pop %v673
        %v690 = vrcp.pop %v676
        %v691 = vrcp.pop %v679
        %v692 = vrcp.pop %v682
        %v693 = vrcp.pop %v685
        %v694 = vmul.f32 %v647, %v686
        %v695 = vmul.f32 %v649, %v687
        %v696 = vmul.f32 %v651, %v688
        %v697 = vmul.f32 %v653, %v689
        %v698 = vmul.f32 %v655, %v690
        %v699 = vmul.f32 %v657, %v691
        %v700 = vmul.f32 %v659, %v692
        %v701 = vmul.f32 %v661, %v693
        %v702 = vpack.c.bf16 %v695, %v694
        %v703 = vpack.c.bf16 %v697, %v696
        %v704 = vpack.c.bf16 %v699, %v698
        %v705 = vpack.c.bf16 %v701, %v700
        %706 = vrot.lane.b32.xlu0 %v400, 64
        %v707 = vpop.permute.xlu0 %706
        %v710 = vsel %vm613, %v702, 0
        %712 = vmatprep.subr.bf16.mxu0 0
        %713 = vmatpush1.bf16.msra.mxu0 %v707
        %714 = vmatprep.subr.bf16.mxu0 0
        %715 = vmatpush1.bf16.msra.mxu0 0
        %716 = vmatprep.subr.bf16.mxu0 0
        %717 = vmatpush1.bf16.msra.mxu0 0
        %718 = vmatprep.subr.bf16.mxu0 0
        %719 = vmatpush1.bf16.msra.mxu0 0
        %720 = vmatprep.subr.bf16.mxu0 0
        %721 = vmatpush1.bf16.msra.mxu0 0
        %722 = vmatprep.subr.bf16.mxu0 0
        %723 = vmatpush1.bf16.msra.mxu0 0
        %724 = vmatprep.subr.bf16.mxu0 0
        %725 = vmatpush1.bf16.msra.mxu0 0
        %726 = vmatprep.subr.bf16.mxu0 0
        %727 = vmatpush1.bf16.msra.mxu0 0
        %728 = vmatprep.subr.bf16.mxu0 0
        %729 = vmatpush1.bf16.msra.mxu0 0
        %730 = vmatprep.subr.bf16.mxu0 0
        %731 = vmatpush1.bf16.msra.mxu0 0
        %732 = vmatprep.subr.bf16.mxu0 0
        %733 = vmatpush1.bf16.msra.mxu0 0
        %734 = vmatprep.subr.bf16.mxu0 0
        %735 = vmatpush1.bf16.msra.mxu0 0
        %736 = vmatprep.subr.bf16.mxu0 0
        %737 = vmatpush1.bf16.msra.mxu0 0
        %738 = vmatprep.subr.bf16.mxu0 0
        %739 = vmatpush1.bf16.msra.mxu0 0
        %740 = vmatprep.subr.bf16.mxu0 0
        %741 = vmatpush1.bf16.msra.mxu0 0
        %742 = vmatprep.subr.bf16.mxu0 0
        %743 = vmatpush1.bf16.msra.mxu0 0
        %744 = vmatprep.mubr.bf16.mxu0 0
        %745 = vmatmul.mubr.bf16.gmra.mrb[0].mxu0 %v710
        %v746 = vpop.f32.mrb[0].mxu0
        %v747 = vadd.f32 0.0, %v746
        %v748 = vpop.f32.mrb[0].mxu0
        %v749 = vpop.f32.mrb[0].mxu0
        %v750 = vadd.f32 0.0, %v749
        %v751 = vpop.f32.mrb[0].mxu0
        %752 = vdwg.mxu0
        %753 = vrot.lane.b32.xlu0 %v401, 64
        %v754 = vpop.permute.xlu0 %753
        %v757 = vsel %vm613, %v703, 0
        %759 = vmatprep.subr.bf16.mxu0 0
        %760 = vmatpush1.bf16.msra.mxu0 %v754
        %761 = vmatprep.subr.bf16.mxu0 0
        %762 = vmatpush1.bf16.msra.mxu0 0
        %763 = vmatprep.subr.bf16.mxu0 0
        %764 = vmatpush1.bf16.msra.mxu0 0
        %765 = vmatprep.subr.bf16.mxu0 0
        %766 = vmatpush1.bf16.msra.mxu0 0
        %767 = vmatprep.subr.bf16.mxu0 0
        %768 = vmatpush1.bf16.msra.mxu0 0
        %769 = vmatprep.subr.bf16.mxu0 0
        %770 = vmatpush1.bf16.msra.mxu0 0
        %771 = vmatprep.subr.bf16.mxu0 0
        %772 = vmatpush1.bf16.msra.mxu0 0
        %773 = vmatprep.subr.bf16.mxu0 0
        %774 = vmatpush1.bf16.msra.mxu0 0
        %775 = vmatprep.subr.bf16.mxu0 0
        %776 = vmatpush1.bf16.msra.mxu0 0
        %777 = vmatprep.subr.bf16.mxu0 0
        %778 = vmatpush1.bf16.msra.mxu0 0
        %779 = vmatprep.subr.bf16.mxu0 0
        %780 = vmatpush1.bf16.msra.mxu0 0
        %781 = vmatprep.subr.bf16.mxu0 0
        %782 = vmatpush1.bf16.msra.mxu0 0
        %783 = vmatprep.subr.bf16.mxu0 0
        %784 = vmatpush1.bf16.msra.mxu0 0
        %785 = vmatprep.subr.bf16.mxu0 0
        %786 = vmatpush1.bf16.msra.mxu0 0
        %787 = vmatprep.subr.bf16.mxu0 0
        %788 = vmatpush1.bf16.msra.mxu0 0
        %789 = vmatprep.subr.bf16.mxu0 0
        %790 = vmatpush1.bf16.msra.mxu0 0
        %791 = vmatprep.mubr.bf16.mxu0 0
        %792 = vmatmul.mubr.bf16.gmra.mrb[0].mxu0 %v757
        %v793 = vpop.f32.mrb[0].mxu0
        %v794 = vadd.f32 0.0, %v793
        %v795 = vpop.f32.mrb[0].mxu0
        %v796 = vpop.f32.mrb[0].mxu0
        %v797 = vadd.f32 0.0, %v796
        %v798 = vpop.f32.mrb[0].mxu0
        %799 = vdwg.mxu0
        %800 = vrot.lane.b32.xlu0 %v402, 64
        %v801 = vpop.permute.xlu0 %800
        %v804 = vsel %vm613, %v704, 0
        %806 = vmatprep.subr.bf16.mxu0 0
        %807 = vmatpush1.bf16.msra.mxu0 %v801
        %808 = vmatprep.subr.bf16.mxu0 0
        %809 = vmatpush1.bf16.msra.mxu0 0
        %810 = vmatprep.subr.bf16.mxu0 0
        %811 = vmatpush1.bf16.msra.mxu0 0
        %812 = vmatprep.subr.bf16.mxu0 0
        %813 = vmatpush1.bf16.msra.mxu0 0
        %814 = vmatprep.subr.bf16.mxu0 0
        %815 = vmatpush1.bf16.msra.mxu0 0
        %816 = vmatprep.subr.bf16.mxu0 0
        %817 = vmatpush1.bf16.msra.mxu0 0
        %818 = vmatprep.subr.bf16.mxu0 0
        %819 = vmatpush1.bf16.msra.mxu0 0
        %820 = vmatprep.subr.bf16.mxu0 0
        %821 = vmatpush1.bf16.msra.mxu0 0
        %822 = vmatprep.subr.bf16.mxu0 0
        %823 = vmatpush1.bf16.msra.mxu0 0
        %824 = vmatprep.subr.bf16.mxu0 0
        %825 = vmatpush1.bf16.msra.mxu0 0
        %826 = vmatprep.subr.bf16.mxu0 0
        %827 = vmatpush1.bf16.msra.mxu0 0
        %828 = vmatprep.subr.bf16.mxu0 0
        %829 = vmatpush1.bf16.msra.mxu0 0
        %830 = vmatprep.subr.bf16.mxu0 0
        %831 = vmatpush1.bf16.msra.mxu0 0
        %832 = vmatprep.subr.bf16.mxu0 0
        %833 = vmatpush1.bf16.msra.mxu0 0
        %834 = vmatprep.subr.bf16.mxu0 0
        %835 = vmatpush1.bf16.msra.mxu0 0
        %836 = vmatprep.subr.bf16.mxu0 0
        %837 = vmatpush1.bf16.msra.mxu0 0
        %838 = vmatprep.mubr.bf16.mxu0 0
        %839 = vmatmul.mubr.bf16.gmra.mrb[0].mxu0 %v804
        %v840 = vpop.f32.mrb[0].mxu0
        %v841 = vadd.f32 0.0, %v840
        %v842 = vpop.f32.mrb[0].mxu0
        %v843 = vpop.f32.mrb[0].mxu0
        %v844 = vadd.f32 0.0, %v843
        %v845 = vpop.f32.mrb[0].mxu0
        %846 = vdwg.mxu0
        %847 = vrot.lane.b32.xlu0 %v403, 64
        %v848 = vpop.permute.xlu0 %847
        %v851 = vsel %vm613, %v705, 0
        %853 = vmatprep.subr.bf16.mxu0 0
        %854 = vmatpush1.bf16.msra.mxu0 %v848
        %855 = vmatprep.subr.bf16.mxu0 0
        %856 = vmatpush1.bf16.msra.mxu0 0
        %857 = vmatprep.subr.bf16.mxu0 0
        %858 = vmatpush1.bf16.msra.mxu0 0
        %859 = vmatprep.subr.bf16.mxu0 0
        %860 = vmatpush1.bf16.msra.mxu0 0
        %861 = vmatprep.subr.bf16.mxu0 0
        %862 = vmatpush1.bf16.msra.mxu0 0
        %863 = vmatprep.subr.bf16.mxu0 0
        %864 = vmatpush1.bf16.msra.mxu0 0
        %865 = vmatprep.subr.bf16.mxu0 0
        %866 = vmatpush1.bf16.msra.mxu0 0
        %867 = vmatprep.subr.bf16.mxu0 0
        %868 = vmatpush1.bf16.msra.mxu0 0
        %869 = vmatprep.subr.bf16.mxu0 0
        %870 = vmatpush1.bf16.msra.mxu0 0
        %871 = vmatprep.subr.bf16.mxu0 0
        %872 = vmatpush1.bf16.msra.mxu0 0
        %873 = vmatprep.subr.bf16.mxu0 0
        %874 = vmatpush1.bf16.msra.mxu0 0
        %875 = vmatprep.subr.bf16.mxu0 0
        %876 = vmatpush1.bf16.msra.mxu0 0
        %877 = vmatprep.subr.bf16.mxu0 0
        %878 = vmatpush1.bf16.msra.mxu0 0
        %879 = vmatprep.subr.bf16.mxu0 0
        %880 = vmatpush1.bf16.msra.mxu0 0
        %881 = vmatprep.subr.bf16.mxu0 0
        %882 = vmatpush1.bf16.msra.mxu0 0
        %883 = vmatprep.subr.bf16.mxu0 0
        %884 = vmatpush1.bf16.msra.mxu0 0
        %885 = vmatprep.mubr.bf16.mxu0 0
        %886 = vmatmul.mubr.bf16.gmra.mrb[0].mxu0 %v851
        %v887 = vpop.f32.mrb[0].mxu0
        %v888 = vadd.f32 0.0, %v887
        %v889 = vpop.f32.mrb[0].mxu0
        %v890 = vpop.f32.mrb[0].mxu0
        %v891 = vadd.f32 0.0, %v890
        %v892 = vpop.f32.mrb[0].mxu0
        %893 = vdwg.mxu0
        %894 = vrot.lane.b32.xlu0 %v400, 120
        %v895 = vpop.permute.xlu0 %894
        %896 = vrot.lane.b32.xlu0 %v400, 88
        %v897 = vpop.permute.xlu0 %896
        %v899 = vsel %vm415, %v895, 0
        %v902 = vsel %vm415, %v897, 0
        %904 = vmatprep.subr.bf16.mxu0 0
        %905 = vmatpush1.bf16.xpose.msra.mxu0 %v902
        %906 = vmatprep.subr.bf16.mxu0 0
        %907 = vmatpush1.bf16.xpose.msra.mxu0 0
        %908 = vmatprep.subr.bf16.mxu0 0
        %909 = vmatpush1.bf16.xpose.msra.mxu0 0
        %910 = vmatprep.subr.bf16.mxu0 0
        %911 = vmatpush1.bf16.xpose.msra.mxu0 0
        %912 = vmatprep.subr.bf16.mxu0 0
        %913 = vmatpush1.bf16.xpose.msra.mxu0 0
        %914 = vmatprep.subr.bf16.mxu0 0
        %915 = vmatpush1.bf16.xpose.msra.mxu0 0
        %916 = vmatprep.subr.bf16.mxu0 0
        %917 = vmatpush1.bf16.xpose.msra.mxu0 0
        %918 = vmatprep.subr.bf16.mxu0 0
        %919 = vmatpush1.bf16.xpose.msra.mxu0 0
        %920 = vmatprep.subr.bf16.mxu0 0
        %921 = vmatpush1.bf16.xpose.msra.mxu0 0
        %922 = vmatprep.subr.bf16.mxu0 0
        %923 = vmatpush1.bf16.xpose.msra.mxu0 0
        %924 = vmatprep.subr.bf16.mxu0 0
        %925 = vmatpush1.bf16.xpose.msra.mxu0 0
        %926 = vmatprep.subr.bf16.mxu0 0
        %927 = vmatpush1.bf16.xpose.msra.mxu0 0
        %928 = vmatprep.subr.bf16.mxu0 0
        %929 = vmatpush1.bf16.xpose.msra.mxu0 0
        %930 = vmatprep.subr.bf16.mxu0 0
        %931 = vmatpush1.bf16.xpose.msra.mxu0 0
        %932 = vmatprep.subr.bf16.mxu0 0
        %933 = vmatpush1.bf16.xpose.msra.mxu0 0
        %934 = vmatprep.subr.bf16.mxu0 0
        %935 = vmatpush1.bf16.xpose.msra.mxu0 0
        %936 = vmatprep.mubr.bf16.mxu0 0
        %937 = vmatmul.mubr.bf16.gmra.mrb[0].mxu0 %v899
        %v938 = vpop.f32.mrb[0].mxu0
        %v939 = vadd.f32 %v406, %v938
        %v940 = vpop.f32.mrb[0].mxu0
        %v941 = vpop.f32.mrb[0].mxu0
        %v942 = vadd.f32 %v407, %v941
        %v943 = vpop.f32.mrb[0].mxu0
        %944 = vdwg.mxu0
        %945 = vrot.lane.b32.xlu0 %v401, 120
        %v946 = vpop.permute.xlu0 %945
        %947 = vrot.lane.b32.xlu0 %v401, 88
        %v948 = vpop.permute.xlu0 %947
        %v950 = vsel %vm415, %v946, 0
        %v953 = vsel %vm415, %v948, 0
        %955 = vmatprep.subr.bf16.mxu0 0
        %956 = vmatpush1.bf16.xpose.msra.mxu0 %v953
        %957 = vmatprep.subr.bf16.mxu0 0
        %958 = vmatpush1.bf16.xpose.msra.mxu0 0
        %959 = vmatprep.subr.bf16.mxu0 0
        %960 = vmatpush1.bf16.xpose.msra.mxu0 0
        %961 = vmatprep.subr.bf16.mxu0 0
        %962 = vmatpush1.bf16.xpose.msra.mxu0 0
        %963 = vmatprep.subr.bf16.mxu0 0
        %964 = vmatpush1.bf16.xpose.msra.mxu0 0
        %965 = vmatprep.subr.bf16.mxu0 0
        %966 = vmatpush1.bf16.xpose.msra.mxu0 0
        %967 = vmatprep.subr.bf16.mxu0 0
        %968 = vmatpush1.bf16.xpose.msra.mxu0 0
        %969 = vmatprep.subr.bf16.mxu0 0
        %970 = vmatpush1.bf16.xpose.msra.mxu0 0
        %971 = vmatprep.subr.bf16.mxu0 0
        %972 = vmatpush1.bf16.xpose.msra.mxu0 0
        %973 = vmatprep.subr.bf16.mxu0 0
        %974 = vmatpush1.bf16.xpose.msra.mxu0 0
        %975 = vmatprep.subr.bf16.mxu0 0
        %976 = vmatpush1.bf16.xpose.msra.mxu0 0
        %977 = vmatprep.subr.bf16.mxu0 0
        %978 = vmatpush1.bf16.xpose.msra.mxu0 0
        %979 = vmatprep.subr.bf16.mxu0 0
        %980 = vmatpush1.bf16.xpose.msra.mxu0 0
        %981 = vmatprep.subr.bf16.mxu0 0
        %982 = vmatpush1.bf16.xpose.msra.mxu0 0
        %983 = vmatprep.subr.bf16.mxu0 0
        %984 = vmatpush1.bf16.xpose.msra.mxu0 0
        %985 = vmatprep.subr.bf16.mxu0 0
        %986 = vmatpush1.bf16.xpose.msra.mxu0 0
        %987 = vmatprep.mubr.bf16.mxu0 0
        %988 = vmatmul.mubr.bf16.gmra.mrb[0].mxu0 %v950
        %v989 = vpop.f32.mrb[0].mxu0
        %v990 = vadd.f32 %v406, %v989
        %v991 = vpop.f32.mrb[0].mxu0
        %v992 = vpop.f32.mrb[0].mxu0
        %v993 = vadd.f32 %v407, %v992
        %v994 = vpop.f32.mrb[0].mxu0
        %995 = vdwg.mxu0
        %996 = vrot.lane.b32.xlu0 %v402, 120
        %v997 = vpop.permute.xlu0 %996
        %998 = vrot.lane.b32.xlu0 %v402, 88
        %v999 = vpop.permute.xlu0 %998
        %v1001 = vsel %vm415, %v997, 0
        %v1004 = vsel %vm415, %v999, 0
        %1006 = vmatprep.subr.bf16.mxu0 0
        %1007 = vmatpush1.bf16.xpose.msra.mxu0 %v1004
        %1008 = vmatprep.subr.bf16.mxu0 0
        %1009 = vmatpush1.bf16.xpose.msra.mxu0 0
        %1010 = vmatprep.subr.bf16.mxu0 0
        %1011 = vmatpush1.bf16.xpose.msra.mxu0 0
        %1012 = vmatprep.subr.bf16.mxu0 0
        %1013 = vmatpush1.bf16.xpose.msra.mxu0 0
        %1014 = vmatprep.subr.bf16.mxu0 0
        %1015 = vmatpush1.bf16.xpose.msra.mxu0 0
        %1016 = vmatprep.subr.bf16.mxu0 0
        %1017 = vmatpush1.bf16.xpose.msra.mxu0 0
        %1018 = vmatprep.subr.bf16.mxu0 0
        %1019 = vmatpush1.bf16.xpose.msra.mxu0 0
        %1020 = vmatprep.subr.bf16.mxu0 0
        %1021 = vmatpush1.bf16.xpose.msra.mxu0 0
        %1022 = vmatprep.subr.bf16.mxu0 0
        %1023 = vmatpush1.bf16.xpose.msra.mxu0 0
        %1024 = vmatprep.subr.bf16.mxu0 0
        %1025 = vmatpush1.bf16.xpose.msra.mxu0 0
        %1026 = vmatprep.subr.bf16.mxu0 0
        %1027 = vmatpush1.bf16.xpose.msra.mxu0 0
        %1028 = vmatprep.subr.bf16.mxu0 0
        %1029 = vmatpush1.bf16.xpose.msra.mxu0 0
        %1030 = vmatprep.subr.bf16.mxu0 0
        %1031 = vmatpush1.bf16.xpose.msra.mxu0 0
        %1032 = vmatprep.subr.bf16.mxu0 0
        %1033 = vmatpush1.bf16.xpose.msra.mxu0 0
        %1034 = vmatprep.subr.bf16.mxu0 0
        %1035 = vmatpush1.bf16.xpose.msra.mxu0 0
        %1036 = vmatprep.subr.bf16.mxu0 0
        %1037 = vmatpush1.bf16.xpose.msra.mxu0 0
        %1038 = vmatprep.mubr.bf16.mxu0 0
        %1039 = vmatmul.mubr.bf16.gmra.mrb[0].mxu0 %v1001
        %v1040 = vpop.f32.mrb[0].mxu0
        %v1041 = vadd.f32 %v406, %v1040
        %v1042 = vpop.f32.mrb[0].mxu0
        %v1043 = vpop.f32.mrb[0].mxu0
        %v1044 = vadd.f32 %v407, %v1043
        %v1045 = vpop.f32.mrb[0].mxu0
        %1046 = vdwg.mxu0
        %1047 = vrot.lane.b32.xlu0 %v403, 120
        %v1048 = vpop.permute.xlu0 %1047
        %1049 = vrot.lane.b32.xlu0 %v403, 88
        %v1050 = vpop.permute.xlu0 %1049
        %v1052 = vsel %vm415, %v1048, 0
        %v1055 = vsel %vm415, %v1050, 0
        %1057 = vmatprep.subr.bf16.mxu0 0
        %1058 = vmatpush1.bf16.xpose.msra.mxu0 %v1055
        %1059 = vmatprep.subr.bf16.mxu0 0
        %1060 = vmatpush1.bf16.xpose.msra.mxu0 0
        %1061 = vmatprep.subr.bf16.mxu0 0
        %1062 = vmatpush1.bf16.xpose.msra.mxu0 0
        %1063 = vmatprep.subr.bf16.mxu0 0
        %1064 = vmatpush1.bf16.xpose.msra.mxu0 0
        %1065 = vmatprep.subr.bf16.mxu0 0
        %1066 = vmatpush1.bf16.xpose.msra.mxu0 0
        %1067 = vmatprep.subr.bf16.mxu0 0
        %1068 = vmatpush1.bf16.xpose.msra.mxu0 0
        %1069 = vmatprep.subr.bf16.mxu0 0
        %1070 = vmatpush1.bf16.xpose.msra.mxu0 0
        %1071 = vmatprep.subr.bf16.mxu0 0
        %1072 = vmatpush1.bf16.xpose.msra.mxu0 0
        %1073 = vmatprep.subr.bf16.mxu0 0
        %1074 = vmatpush1.bf16.xpose.msra.mxu0 0
        %1075 = vmatprep.subr.bf16.mxu0 0
        %1076 = vmatpush1.bf16.xpose.msra.mxu0 0
        %1077 = vmatprep.subr.bf16.mxu0 0
        %1078 = vmatpush1.bf16.xpose.msra.mxu0 0
        %1079 = vmatprep.subr.bf16.mxu0 0
        %1080 = vmatpush1.bf16.xpose.msra.mxu0 0
        %1081 = vmatprep.subr.bf16.mxu0 0
        %1082 = vmatpush1.bf16.xpose.msra.mxu0 0
        %1083 = vmatprep.subr.bf16.mxu0 0
        %1084 = vmatpush1.bf16.xpose.msra.mxu0 0
        %1085 = vmatprep.subr.bf16.mxu0 0
        %1086 = vmatpush1.bf16.xpose.msra.mxu0 0
        %1087 = vmatprep.subr.bf16.mxu0 0
        %1088 = vmatpush1.bf16.xpose.msra.mxu0 0
        %1089 = vmatprep.mubr.bf16.mxu0 0
        %1090 = vmatmul.mubr.bf16.gmra.mrb[0].mxu0 %v1052
        %v1091 = vpop.f32.mrb[0].mxu0
        %v1092 = vadd.f32 %v406, %v1091
        %v1093 = vpop.f32.mrb[0].mxu0
        %v1094 = vpop.f32.mrb[0].mxu0
        %v1095 = vadd.f32 %v407, %v1094
        %v1096 = vpop.f32.mrb[0].mxu0
        %1097 = vdwg.mxu0
        %v1098 = vsel %vm613, %v939, -inf
        %1099 = vmax.xlane.f32.xlu0 %v1098
        %v1100 = vpop.xlane.xlu0 %1099
        %v1101 = vsel %vm613, %v942, -inf
        %1102 = vmax.xlane.f32.xlu0 %v1101
        %v1103 = vpop.xlane.xlu0 %1102
        %v1104 = vsel %vm613, %v990, -inf
        %1105 = vmax.xlane.f32.xlu0 %v1104
        %v1106 = vpop.xlane.xlu0 %1105
        %v1107 = vsel %vm613, %v993, -inf
        %1108 = vmax.xlane.f32.xlu0 %v1107
        %v1109 = vpop.xlane.xlu0 %1108
        %v1110 = vsel %vm613, %v1041, -inf
        %1111 = vmax.xlane.f32.xlu0 %v1110
        %v1112 = vpop.xlane.xlu0 %1111
        %v1113 = vsel %vm613, %v1044, -inf
        %1114 = vmax.xlane.f32.xlu0 %v1113
        %v1115 = vpop.xlane.xlu0 %1114
        %v1116 = vsel %vm613, %v1092, -inf
        %1117 = vmax.xlane.f32.xlu0 %v1116
        %v1118 = vpop.xlane.xlu0 %1117
        %v1119 = vsel %vm613, %v1095, -inf
        %1120 = vmax.xlane.f32.xlu0 %v1119
        %v1121 = vpop.xlane.xlu0 %1120
        %v1122 = vsub.f32 %v939, %v1100
        %v1123 = vsub.f32 %v942, %v1103
        %v1124 = vsub.f32 %v990, %v1106
        %v1125 = vsub.f32 %v993, %v1109
        %v1126 = vsub.f32 %v1041, %v1112
        %v1127 = vsub.f32 %v1044, %v1115
        %v1128 = vsub.f32 %v1092, %v1118
        %v1129 = vsub.f32 %v1095, %v1121
        %v1130 = vmul.f32 %v1122, 1.442695
        %v1131 = vpow.pop %v1130
        %v1132 = vmul.f32 %v1123, 1.442695
        %v1133 = vpow.pop %v1132
        %v1134 = vmul.f32 %v1124, 1.442695
        %v1135 = vpow.pop %v1134
        %v1136 = vmul.f32 %v1125, 1.442695
        %v1137 = vpow.pop %v1136
        %v1138 = vmul.f32 %v1126, 1.442695
        %v1139 = vpow.pop %v1138
        %v1140 = vmul.f32 %v1127, 1.442695
        %v1141 = vpow.pop %v1140
        %v1142 = vmul.f32 %v1128, 1.442695
        %v1143 = vpow.pop %v1142
        %v1144 = vmul.f32 %v1129, 1.442695
        %v1145 = vpow.pop %v1144
        %v1146 = vsel %vm613, %v1131, 0.0
        %1147 = vadd.xlane.f32.xlu0 %v1146
        %v1148 = vpop.xlane.xlu0 %1147
        %v1149 = vsel %vm613, %v1133, 0.0
        %1150 = vadd.xlane.f32.xlu0 %v1149
        %v1151 = vpop.xlane.xlu0 %1150
        %v1152 = vsel %vm613, %v1135, 0.0
        %1153 = vadd.xlane.f32.xlu0 %v1152
        %v1154 = vpop.xlane.xlu0 %1153
        %v1155 = vsel %vm613, %v1137, 0.0
        %1156 = vadd.xlane.f32.xlu0 %v1155
        %v1157 = vpop.xlane.xlu0 %1156
        %v1158 = vsel %vm613, %v1139, 0.0
        %1159 = vadd.xlane.f32.xlu0 %v1158
        %v1160 = vpop.xlane.xlu0 %1159
        %v1161 = vsel %vm613, %v1141, 0.0
        %1162 = vadd.xlane.f32.xlu0 %v1161
        %v1163 = vpop.xlane.xlu0 %1162
        %v1164 = vsel %vm613, %v1143, 0.0
        %1165 = vadd.xlane.f32.xlu0 %v1164
        %v1166 = vpop.xlane.xlu0 %1165
        %v1167 = vsel %vm613, %v1145, 0.0
        %1168 = vadd.xlane.f32.xlu0 %v1167
        %v1169 = vpop.xlane.xlu0 %1168
        %v1170 = vrcp.pop %v1148
        %v1171 = vrcp.pop %v1151
        %v1172 = vrcp.pop %v1154
        %v1173 = vrcp.pop %v1157
        %v1174 = vrcp.pop %v1160
        %v1175 = vrcp.pop %v1163
        %v1176 = vrcp.pop %v1166
        %v1177 = vrcp.pop %v1169
        %v1178 = vmul.f32 %v1131, %v1170
        %v1179 = vmul.f32 %v1133, %v1171
        %v1180 = vmul.f32 %v1135, %v1172
        %v1181 = vmul.f32 %v1137, %v1173
        %v1182 = vmul.f32 %v1139, %v1174
        %v1183 = vmul.f32 %v1141, %v1175
        %v1184 = vmul.f32 %v1143, %v1176
        %v1185 = vmul.f32 %v1145, %v1177
        %v1186 = vpack.c.bf16 %v1179, %v1178
        %v1187 = vpack.c.bf16 %v1181, %v1180
        %v1188 = vpack.c.bf16 %v1183, %v1182
        %v1189 = vpack.c.bf16 %v1185, %v1184
        %1190 = vrot.lane.b32.xlu0 %v400, 56
        %v1191 = vpop.permute.xlu0 %1190
        %v1194 = vsel %vm613, %v1186, 0
        %1196 = vmatprep.subr.bf16.mxu0 0
        %1197 = vmatpush1.bf16.msra.mxu0 %v1191
        %1198 = vmatprep.subr.bf16.mxu0 0
        %1199 = vmatpush1.bf16.msra.mxu0 0
        %1200 = vmatprep.subr.bf16.mxu0 0
        %1201 = vmatpush1.bf16.msra.mxu0 0
        %1202 = vmatprep.subr.bf16.mxu0 0
        %1203 = vmatpush1.bf16.msra.mxu0 0
        %1204 = vmatprep.subr.bf16.mxu0 0
        %1205 = vmatpush1.bf16.msra.mxu0 0
        %1206 = vmatprep.subr.bf16.mxu0 0
        %1207 = vmatpush1.bf16.msra.mxu0 0
        %1208 = vmatprep.subr.bf16.mxu0 0
        %1209 = vmatpush1.bf16.msra.mxu0 0
        %1210 = vmatprep.subr.bf16.mxu0 0
        %1211 = vmatpush1.bf16.msra.mxu0 0
        %1212 = vmatprep.subr.bf16.mxu0 0
        %1213 = vmatpush1.bf16.msra.mxu0 0
        %1214 = vmatprep.subr.bf16.mxu0 0
        %1215 = vmatpush1.bf16.msra.mxu0 0
        %1216 = vmatprep.subr.bf16.mxu0 0
        %1217 = vmatpush1.bf16.msra.mxu0 0
        %1218 = vmatprep.subr.bf16.mxu0 0
        %1219 = vmatpush1.bf16.msra.mxu0 0
        %1220 = vmatprep.subr.bf16.mxu0 0
        %1221 = vmatpush1.bf16.msra.mxu0 0
        %1222 = vmatprep.subr.bf16.mxu0 0
        %1223 = vmatpush1.bf16.msra.mxu0 0
        %1224 = vmatprep.subr.bf16.mxu0 0
        %1225 = vmatpush1.bf16.msra.mxu0 0
        %1226 = vmatprep.subr.bf16.mxu0 0
        %1227 = vmatpush1.bf16.msra.mxu0 0
        %1228 = vmatprep.mubr.bf16.mxu0 0
        %1229 = vmatmul.mubr.bf16.gmra.mrb[0].mxu0 %v1194
        %v1230 = vpop.f32.mrb[0].mxu0
        %v1231 = vadd.f32 0.0, %v1230
        %v1232 = vpop.f32.mrb[0].mxu0
        %v1233 = vpop.f32.mrb[0].mxu0
        %v1234 = vadd.f32 0.0, %v1233
        %v1235 = vpop.f32.mrb[0].mxu0
        %1236 = vdwg.mxu0
        %1237 = vrot.lane.b32.xlu0 %v401, 56
        %v1238 = vpop.permute.xlu0 %1237
        %v1241 = vsel %vm613, %v1187, 0
        %1243 = vmatprep.subr.bf16.mxu0 0
        %1244 = vmatpush1.bf16.msra.mxu0 %v1238
        %1245 = vmatprep.subr.bf16.mxu0 0
        %1246 = vmatpush1.bf16.msra.mxu0 0
        %1247 = vmatprep.subr.bf16.mxu0 0
        %1248 = vmatpush1.bf16.msra.mxu0 0
        %1249 = vmatprep.subr.bf16.mxu0 0
        %1250 = vmatpush1.bf16.msra.mxu0 0
        %1251 = vmatprep.subr.bf16.mxu0 0
        %1252 = vmatpush1.bf16.msra.mxu0 0
        %1253 = vmatprep.subr.bf16.mxu0 0
        %1254 = vmatpush1.bf16.msra.mxu0 0
        %1255 = vmatprep.subr.bf16.mxu0 0
        %1256 = vmatpush1.bf16.msra.mxu0 0
        %1257 = vmatprep.subr.bf16.mxu0 0
        %1258 = vmatpush1.bf16.msra.mxu0 0
        %1259 = vmatprep.subr.bf16.mxu0 0
        %1260 = vmatpush1.bf16.msra.mxu0 0
        %1261 = vmatprep.subr.bf16.mxu0 0
        %1262 = vmatpush1.bf16.msra.mxu0 0
        %1263 = vmatprep.subr.bf16.mxu0 0
        %1264 = vmatpush1.bf16.msra.mxu0 0
        %1265 = vmatprep.subr.bf16.mxu0 0
        %1266 = vmatpush1.bf16.msra.mxu0 0
        %1267 = vmatprep.subr.bf16.mxu0 0
        %1268 = vmatpush1.bf16.msra.mxu0 0
        %1269 = vmatprep.subr.bf16.mxu0 0
        %1270 = vmatpush1.bf16.msra.mxu0 0
        %1271 = vmatprep.subr.bf16.mxu0 0
        %1272 = vmatpush1.bf16.msra.mxu0 0
        %1273 = vmatprep.subr.bf16.mxu0 0
        %1274 = vmatpush1.bf16.msra.mxu0 0
        %1275 = vmatprep.mubr.bf16.mxu0 0
        %1276 = vmatmul.mubr.bf16.gmra.mrb[0].mxu0 %v1241
        %v1277 = vpop.f32.mrb[0].mxu0
        %v1278 = vadd.f32 0.0, %v1277
        %v1279 = vpop.f32.mrb[0].mxu0
        %v1280 = vpop.f32.mrb[0].mxu0
        %v1281 = vadd.f32 0.0, %v1280
        %v1282 = vpop.f32.mrb[0].mxu0
        %1283 = vdwg.mxu0
        %1284 = vrot.lane.b32.xlu0 %v402, 56
        %v1285 = vpop.permute.xlu0 %1284
        %v1288 = vsel %vm613, %v1188, 0
        %1290 = vmatprep.subr.bf16.mxu0 0
        %1291 = vmatpush1.bf16.msra.mxu0 %v1285
        %1292 = vmatprep.subr.bf16.mxu0 0
        %1293 = vmatpush1.bf16.msra.mxu0 0
        %1294 = vmatprep.subr.bf16.mxu0 0
        %1295 = vmatpush1.bf16.msra.mxu0 0
        %1296 = vmatprep.subr.bf16.mxu0 0
        %1297 = vmatpush1.bf16.msra.mxu0 0
        %1298 = vmatprep.subr.bf16.mxu0 0
        %1299 = vmatpush1.bf16.msra.mxu0 0
        %1300 = vmatprep.subr.bf16.mxu0 0
        %1301 = vmatpush1.bf16.msra.mxu0 0
        %1302 = vmatprep.subr.bf16.mxu0 0
        %1303 = vmatpush1.bf16.msra.mxu0 0
        %1304 = vmatprep.subr.bf16.mxu0 0
        %1305 = vmatpush1.bf16.msra.mxu0 0
        %1306 = vmatprep.subr.bf16.mxu0 0
        %1307 = vmatpush1.bf16.msra.mxu0 0
        %1308 = vmatprep.subr.bf16.mxu0 0
        %1309 = vmatpush1.bf16.msra.mxu0 0
        %1310 = vmatprep.subr.bf16.mxu0 0
        %1311 = vmatpush1.bf16.msra.mxu0 0
        %1312 = vmatprep.subr.bf16.mxu0 0
        %1313 = vmatpush1.bf16.msra.mxu0 0
        %1314 = vmatprep.subr.bf16.mxu0 0
        %1315 = vmatpush1.bf16.msra.mxu0 0
        %1316 = vmatprep.subr.bf16.mxu0 0
        %1317 = vmatpush1.bf16.msra.mxu0 0
        %1318 = vmatprep.subr.bf16.mxu0 0
        %1319 = vmatpush1.bf16.msra.mxu0 0
        %1320 = vmatprep.subr.bf16.mxu0 0
        %1321 = vmatpush1.bf16.msra.mxu0 0
        %1322 = vmatprep.mubr.bf16.mxu0 0
        %1323 = vmatmul.mubr.bf16.gmra.mrb[0].mxu0 %v1288
        %v1324 = vpop.f32.mrb[0].mxu0
        %v1325 = vadd.f32 0.0, %v1324
        %v1326 = vpop.f32.mrb[0].mxu0
        %v1327 = vpop.f32.mrb[0].mxu0
        %v1328 = vadd.f32 0.0, %v1327
        %v1329 = vpop.f32.mrb[0].mxu0
        %1330 = vdwg.mxu0
        %1331 = vrot.lane.b32.xlu0 %v403, 56
        %v1332 = vpop.permute.xlu0 %1331
        %v1335 = vsel %vm613, %v1189, 0
        %1337 = vmatprep.subr.bf16.mxu0 0
        %1338 = vmatpush1.bf16.msra.mxu0 %v1332
        %1339 = vmatprep.subr.bf16.mxu0 0
        %1340 = vmatpush1.bf16.msra.mxu0 0
        %1341 = vmatprep.subr.bf16.mxu0 0
        %1342 = vmatpush1.bf16.msra.mxu0 0
        %1343 = vmatprep.subr.bf16.mxu0 0
        %1344 = vmatpush1.bf16.msra.mxu0 0
        %1345 = vmatprep.subr.bf16.mxu0 0
        %1346 = vmatpush1.bf16.msra.mxu0 0
        %1347 = vmatprep.subr.bf16.mxu0 0
        %1348 = vmatpush1.bf16.msra.mxu0 0
        %1349 = vmatprep.subr.bf16.mxu0 0
        %1350 = vmatpush1.bf16.msra.mxu0 0
        %1351 = vmatprep.subr.bf16.mxu0 0
        %1352 = vmatpush1.bf16.msra.mxu0 0
        %1353 = vmatprep.subr.bf16.mxu0 0
        %1354 = vmatpush1.bf16.msra.mxu0 0
        %1355 = vmatprep.subr.bf16.mxu0 0
        %1356 = vmatpush1.bf16.msra.mxu0 0
        %1357 = vmatprep.subr.bf16.mxu0 0
        %1358 = vmatpush1.bf16.msra.mxu0 0
        %1359 = vmatprep.subr.bf16.mxu0 0
        %1360 = vmatpush1.bf16.msra.mxu0 0
        %1361 = vmatprep.subr.bf16.mxu0 0
        %1362 = vmatpush1.bf16.msra.mxu0 0
        %1363 = vmatprep.subr.bf16.mxu0 0
        %1364 = vmatpush1.bf16.msra.mxu0 0
        %1365 = vmatprep.subr.bf16.mxu0 0
        %1366 = vmatpush1.bf16.msra.mxu0 0
        %1367 = vmatprep.subr.bf16.mxu0 0
        %1368 = vmatpush1.bf16.msra.mxu0 0
        %1369 = vmatprep.mubr.bf16.mxu0 0
        %1370 = vmatmul.mubr.bf16.gmra.mrb[0].mxu0 %v1335
        %v1371 = vpop.f32.mrb[0].mxu0
        %v1372 = vadd.f32 0.0, %v1371
        %v1373 = vpop.f32.mrb[0].mxu0
        %v1374 = vpop.f32.mrb[0].mxu0
        %v1375 = vadd.f32 0.0, %v1374
        %v1376 = vpop.f32.mrb[0].mxu0
        %1377 = vdwg.mxu0
        %1378 = vrot.lane.b32.xlu0 %v400, 112
        %v1379 = vpop.permute.xlu0 %1378
        %1380 = vrot.lane.b32.xlu0 %v400, 80
        %v1381 = vpop.permute.xlu0 %1380
        %v1383 = vsel %vm415, %v1379, 0
        %v1386 = vsel %vm415, %v1381, 0
        %1388 = vmatprep.subr.bf16.mxu0 0
        %1389 = vmatpush1.bf16.xpose.msra.mxu0 %v1386
        %1390 = vmatprep.subr.bf16.mxu0 0
        %1391 = vmatpush1.bf16.xpose.msra.mxu0 0
        %1392 = vmatprep.subr.bf16.mxu0 0
        %1393 = vmatpush1.bf16.xpose.msra.mxu0 0
        %1394 = vmatprep.subr.bf16.mxu0 0
        %1395 = vmatpush1.bf16.xpose.msra.mxu0 0
        %1396 = vmatprep.subr.bf16.mxu0 0
        %1397 = vmatpush1.bf16.xpose.msra.mxu0 0
        %1398 = vmatprep.subr.bf16.mxu0 0
        %1399 = vmatpush1.bf16.xpose.msra.mxu0 0
        %1400 = vmatprep.subr.bf16.mxu0 0
        %1401 = vmatpush1.bf16.xpose.msra.mxu0 0
        %1402 = vmatprep.subr.bf16.mxu0 0
        %1403 = vmatpush1.bf16.xpose.msra.mxu0 0
        %1404 = vmatprep.subr.bf16.mxu0 0
        %1405 = vmatpush1.bf16.xpose.msra.mxu0 0
        %1406 = vmatprep.subr.bf16.mxu0 0
        %1407 = vmatpush1.bf16.xpose.msra.mxu0 0
        %1408 = vmatprep.subr.bf16.mxu0 0
        %1409 = vmatpush1.bf16.xpose.msra.mxu0 0
        %1410 = vmatprep.subr.bf16.mxu0 0
        %1411 = vmatpush1.bf16.xpose.msra.mxu0 0
        %1412 = vmatprep.subr.bf16.mxu0 0
        %1413 = vmatpush1.bf16.xpose.msra.mxu0 0
        %1414 = vmatprep.subr.bf16.mxu0 0
        %1415 = vmatpush1.bf16.xpose.msra.mxu0 0
        %1416 = vmatprep.subr.bf16.mxu0 0
        %1417 = vmatpush1.bf16.xpose.msra.mxu0 0
        %1418 = vmatprep.subr.bf16.mxu0 0
        %1419 = vmatpush1.bf16.xpose.msra.mxu0 0
        %1420 = vmatprep.mubr.bf16.mxu0 0
        %1421 = vmatmul.mubr.bf16.gmra.mrb[0].mxu0 %v1383
        %v1422 = vpop.f32.mrb[0].mxu0
        %v1423 = vadd.f32 %v408, %v1422
        %v1424 = vpop.f32.mrb[0].mxu0
        %v1425 = vpop.f32.mrb[0].mxu0
        %v1426 = vadd.f32 %v409, %v1425
        %v1427 = vpop.f32.mrb[0].mxu0
        %1428 = vdwg.mxu0
        %1429 = vrot.lane.b32.xlu0 %v401, 112
        %v1430 = vpop.permute.xlu0 %1429
        %1431 = vrot.lane.b32.xlu0 %v401, 80
        %v1432 = vpop.permute.xlu0 %1431
        %v1434 = vsel %vm415, %v1430, 0
        %v1437 = vsel %vm415, %v1432, 0
        %1439 = vmatprep.subr.bf16.mxu0 0
        %1440 = vmatpush1.bf16.xpose.msra.mxu0 %v1437
        %1441 = vmatprep.subr.bf16.mxu0 0
        %1442 = vmatpush1.bf16.xpose.msra.mxu0 0
        %1443 = vmatprep.subr.bf16.mxu0 0
        %1444 = vmatpush1.bf16.xpose.msra.mxu0 0
        %1445 = vmatprep.subr.bf16.mxu0 0
        %1446 = vmatpush1.bf16.xpose.msra.mxu0 0
        %1447 = vmatprep.subr.bf16.mxu0 0
        %1448 = vmatpush1.bf16.xpose.msra.mxu0 0
        %1449 = vmatprep.subr.bf16.mxu0 0
        %1450 = vmatpush1.bf16.xpose.msra.mxu0 0
        %1451 = vmatprep.subr.bf16.mxu0 0
        %1452 = vmatpush1.bf16.xpose.msra.mxu0 0
        %1453 = vmatprep.subr.bf16.mxu0 0
        %1454 = vmatpush1.bf16.xpose.msra.mxu0 0
        %1455 = vmatprep.subr.bf16.mxu0 0
        %1456 = vmatpush1.bf16.xpose.msra.mxu0 0
        %1457 = vmatprep.subr.bf16.mxu0 0
        %1458 = vmatpush1.bf16.xpose.msra.mxu0 0
        %1459 = vmatprep.subr.bf16.mxu0 0
        %1460 = vmatpush1.bf16.xpose.msra.mxu0 0
        %1461 = vmatprep.subr.bf16.mxu0 0
        %1462 = vmatpush1.bf16.xpose.msra.mxu0 0
        %1463 = vmatprep.subr.bf16.mxu0 0
        %1464 = vmatpush1.bf16.xpose.msra.mxu0 0
        %1465 = vmatprep.subr.bf16.mxu0 0
        %1466 = vmatpush1.bf16.xpose.msra.mxu0 0
        %1467 = vmatprep.subr.bf16.mxu0 0
        %1468 = vmatpush1.bf16.xpose.msra.mxu0 0
        %1469 = vmatprep.subr.bf16.mxu0 0
        %1470 = vmatpush1.bf16.xpose.msra.mxu0 0
        %1471 = vmatprep.mubr.bf16.mxu0 0
        %1472 = vmatmul.mubr.bf16.gmra.mrb[0].mxu0 %v1434
        %v1473 = vpop.f32.mrb[0].mxu0
        %v1474 = vadd.f32 %v408, %v1473
        %v1475 = vpop.f32.mrb[0].mxu0
        %v1476 = vpop.f32.mrb[0].mxu0
        %v1477 = vadd.f32 %v409, %v1476
        %v1478 = vpop.f32.mrb[0].mxu0
        %1479 = vdwg.mxu0
        %1480 = vrot.lane.b32.xlu0 %v402, 112
        %v1481 = vpop.permute.xlu0 %1480
        %1482 = vrot.lane.b32.xlu0 %v402, 80
        %v1483 = vpop.permute.xlu0 %1482
        %v1485 = vsel %vm415, %v1481, 0
        %v1488 = vsel %vm415, %v1483, 0
        %1490 = vmatprep.subr.bf16.mxu0 0
        %1491 = vmatpush1.bf16.xpose.msra.mxu0 %v1488
        %1492 = vmatprep.subr.bf16.mxu0 0
        %1493 = vmatpush1.bf16.xpose.msra.mxu0 0
        %1494 = vmatprep.subr.bf16.mxu0 0
        %1495 = vmatpush1.bf16.xpose.msra.mxu0 0
        %1496 = vmatprep.subr.bf16.mxu0 0
        %1497 = vmatpush1.bf16.xpose.msra.mxu0 0
        %1498 = vmatprep.subr.bf16.mxu0 0
        %1499 = vmatpush1.bf16.xpose.msra.mxu0 0
        %1500 = vmatprep.subr.bf16.mxu0 0
        %1501 = vmatpush1.bf16.xpose.msra.mxu0 0
        %1502 = vmatprep.subr.bf16.mxu0 0
        %1503 = vmatpush1.bf16.xpose.msra.mxu0 0
        %1504 = vmatprep.subr.bf16.mxu0 0
        %1505 = vmatpush1.bf16.xpose.msra.mxu0 0
        %1506 = vmatprep.subr.bf16.mxu0 0
        %1507 = vmatpush1.bf16.xpose.msra.mxu0 0
        %1508 = vmatprep.subr.bf16.mxu0 0
        %1509 = vmatpush1.bf16.xpose.msra.mxu0 0
        %1510 = vmatprep.subr.bf16.mxu0 0
        %1511 = vmatpush1.bf16.xpose.msra.mxu0 0
        %1512 = vmatprep.subr.bf16.mxu0 0
        %1513 = vmatpush1.bf16.xpose.msra.mxu0 0
        %1514 = vmatprep.subr.bf16.mxu0 0
        %1515 = vmatpush1.bf16.xpose.msra.mxu0 0
        %1516 = vmatprep.subr.bf16.mxu0 0
        %1517 = vmatpush1.bf16.xpose.msra.mxu0 0
        %1518 = vmatprep.subr.bf16.mxu0 0
        %1519 = vmatpush1.bf16.xpose.msra.mxu0 0
        %1520 = vmatprep.subr.bf16.mxu0 0
        %1521 = vmatpush1.bf16.xpose.msra.mxu0 0
        %1522 = vmatprep.mubr.bf16.mxu0 0
        %1523 = vmatmul.mubr.bf16.gmra.mrb[0].mxu0 %v1485
        %v1524 = vpop.f32.mrb[0].mxu0
        %v1525 = vadd.f32 %v408, %v1524
        %v1526 = vpop.f32.mrb[0].mxu0
        %v1527 = vpop.f32.mrb[0].mxu0
        %v1528 = vadd.f32 %v409, %v1527
        %v1529 = vpop.f32.mrb[0].mxu0
        %1530 = vdwg.mxu0
        %1531 = vrot.lane.b32.xlu0 %v403, 112
        %v1532 = vpop.permute.xlu0 %1531
        %1533 = vrot.lane.b32.xlu0 %v403, 80
        %v1534 = vpop.permute.xlu0 %1533
        %v1536 = vsel %vm415, %v1532, 0
        %v1539 = vsel %vm415, %v1534, 0
        %1541 = vmatprep.subr.bf16.mxu0 0
        %1542 = vmatpush1.bf16.xpose.msra.mxu0 %v1539
        %1543 = vmatprep.subr.bf16.mxu0 0
        %1544 = vmatpush1.bf16.xpose.msra.mxu0 0
        %1545 = vmatprep.subr.bf16.mxu0 0
        %1546 = vmatpush1.bf16.xpose.msra.mxu0 0
        %1547 = vmatprep.subr.bf16.mxu0 0
        %1548 = vmatpush1.bf16.xpose.msra.mxu0 0
        %1549 = vmatprep.subr.bf16.mxu0 0
        %1550 = vmatpush1.bf16.xpose.msra.mxu0 0
        %1551 = vmatprep.subr.bf16.mxu0 0
        %1552 = vmatpush1.bf16.xpose.msra.mxu0 0
        %1553 = vmatprep.subr.bf16.mxu0 0
        %1554 = vmatpush1.bf16.xpose.msra.mxu0 0
        %1555 = vmatprep.subr.bf16.mxu0 0
        %1556 = vmatpush1.bf16.xpose.msra.mxu0 0
        %1557 = vmatprep.subr.bf16.mxu0 0
        %1558 = vmatpush1.bf16.xpose.msra.mxu0 0
        %1559 = vmatprep.subr.bf16.mxu0 0
        %1560 = vmatpush1.bf16.xpose.msra.mxu0 0
        %1561 = vmatprep.subr.bf16.mxu0 0
        %1562 = vmatpush1.bf16.xpose.msra.mxu0 0
        %1563 = vmatprep.subr.bf16.mxu0 0
        %1564 = vmatpush1.bf16.xpose.msra.mxu0 0
        %1565 = vmatprep.subr.bf16.mxu0 0
        %1566 = vmatpush1.bf16.xpose.msra.mxu0 0
        %1567 = vmatprep.subr.bf16.mxu0 0
        %1568 = vmatpush1.bf16.xpose.msra.mxu0 0
        %1569 = vmatprep.subr.bf16.mxu0 0
        %1570 = vmatpush1.bf16.xpose.msra.mxu0 0
        %1571 = vmatprep.subr.bf16.mxu0 0
        %1572 = vmatpush1.bf16.xpose.msra.mxu0 0
        %1573 = vmatprep.mubr.bf16.mxu0 0
        %1574 = vmatmul.mubr.bf16.gmra.mrb[0].mxu0 %v1536
        %v1575 = vpop.f32.mrb[0].mxu0
        %v1576 = vadd.f32 %v408, %v1575
        %v1577 = vpop.f32.mrb[0].mxu0
        %v1578 = vpop.f32.mrb[0].mxu0
        %v1579 = vadd.f32 %v409, %v1578
        %v1580 = vpop.f32.mrb[0].mxu0
        %1581 = vdwg.mxu0
        %v1582 = vsel %vm613, %v1423, -inf
        %1583 = vmax.xlane.f32.xlu0 %v1582
        %v1584 = vpop.xlane.xlu0 %1583
        %v1585 = vsel %vm613, %v1426, -inf
        %1586 = vmax.xlane.f32.xlu0 %v1585
        %v1587 = vpop.xlane.xlu0 %1586
        %v1588 = vsel %vm613, %v1474, -inf
        %1589 = vmax.xlane.f32.xlu0 %v1588
        %v1590 = vpop.xlane.xlu0 %1589
        %v1591 = vsel %vm613, %v1477, -inf
        %1592 = vmax.xlane.f32.xlu0 %v1591
        %v1593 = vpop.xlane.xlu0 %1592
        %v1594 = vsel %vm613, %v1525, -inf
        %1595 = vmax.xlane.f32.xlu0 %v1594
        %v1596 = vpop.xlane.xlu0 %1595
        %v1597 = vsel %vm613, %v1528, -inf
        %1598 = vmax.xlane.f32.xlu0 %v1597
        %v1599 = vpop.xlane.xlu0 %1598
        %v1600 = vsel %vm613, %v1576, -inf
        %1601 = vmax.xlane.f32.xlu0 %v1600
        %v1602 = vpop.xlane.xlu0 %1601
        %v1603 = vsel %vm613, %v1579, -inf
        %1604 = vmax.xlane.f32.xlu0 %v1603
        %v1605 = vpop.xlane.xlu0 %1604
        %v1606 = vsub.f32 %v1423, %v1584
        %v1607 = vsub.f32 %v1426, %v1587
        %v1608 = vsub.f32 %v1474, %v1590
        %v1609 = vsub.f32 %v1477, %v1593
        %v1610 = vsub.f32 %v1525, %v1596
        %v1611 = vsub.f32 %v1528, %v1599
        %v1612 = vsub.f32 %v1576, %v1602
        %v1613 = vsub.f32 %v1579, %v1605
        %v1614 = vmul.f32 %v1606, 1.442695
        %v1615 = vpow.pop %v1614
        %v1616 = vmul.f32 %v1607, 1.442695
        %v1617 = vpow.pop %v1616
        %v1618 = vmul.f32 %v1608, 1.442695
        %v1619 = vpow.pop %v1618
        %v1620 = vmul.f32 %v1609, 1.442695
        %v1621 = vpow.pop %v1620
        %v1622 = vmul.f32 %v1610, 1.442695
        %v1623 = vpow.pop %v1622
        %v1624 = vmul.f32 %v1611, 1.442695
        %v1625 = vpow.pop %v1624
        %v1626 = vmul.f32 %v1612, 1.442695
        %v1627 = vpow.pop %v1626
        %v1628 = vmul.f32 %v1613, 1.442695
        %v1629 = vpow.pop %v1628
        %v1630 = vsel %vm613, %v1615, 0.0
        %1631 = vadd.xlane.f32.xlu0 %v1630
        %v1632 = vpop.xlane.xlu0 %1631
        %v1633 = vsel %vm613, %v1617, 0.0
        %1634 = vadd.xlane.f32.xlu0 %v1633
        %v1635 = vpop.xlane.xlu0 %1634
        %v1636 = vsel %vm613, %v1619, 0.0
        %1637 = vadd.xlane.f32.xlu0 %v1636
        %v1638 = vpop.xlane.xlu0 %1637
        %v1639 = vsel %vm613, %v1621, 0.0
        %1640 = vadd.xlane.f32.xlu0 %v1639
        %v1641 = vpop.xlane.xlu0 %1640
        %v1642 = vsel %vm613, %v1623, 0.0
        %1643 = vadd.xlane.f32.xlu0 %v1642
        %v1644 = vpop.xlane.xlu0 %1643
        %v1645 = vsel %vm613, %v1625, 0.0
        %1646 = vadd.xlane.f32.xlu0 %v1645
        %v1647 = vpop.xlane.xlu0 %1646
        %v1648 = vsel %vm613, %v1627, 0.0
        %1649 = vadd.xlane.f32.xlu0 %v1648
        %v1650 = vpop.xlane.xlu0 %1649
        %v1651 = vsel %vm613, %v1629, 0.0
        %1652 = vadd.xlane.f32.xlu0 %v1651
        %v1653 = vpop.xlane.xlu0 %1652
        %v1654 = vrcp.pop %v1632
        %v1655 = vrcp.pop %v1635
        %v1656 = vrcp.pop %v1638
        %v1657 = vrcp.pop %v1641
        %v1658 = vrcp.pop %v1644
        %v1659 = vrcp.pop %v1647
        %v1660 = vrcp.pop %v1650
        %v1661 = vrcp.pop %v1653
        %v1662 = vmul.f32 %v1615, %v1654
        %v1663 = vmul.f32 %v1617, %v1655
        %v1664 = vmul.f32 %v1619, %v1656
        %v1665 = vmul.f32 %v1621, %v1657
        %v1666 = vmul.f32 %v1623, %v1658
        %v1667 = vmul.f32 %v1625, %v1659
        %v1668 = vmul.f32 %v1627, %v1660
        %v1669 = vmul.f32 %v1629, %v1661
        %v1670 = vpack.c.bf16 %v1663, %v1662
        %v1671 = vpack.c.bf16 %v1665, %v1664
        %v1672 = vpack.c.bf16 %v1667, %v1666
        %v1673 = vpack.c.bf16 %v1669, %v1668
        %1674 = vrot.lane.b32.xlu0 %v400, 48
        %v1675 = vpop.permute.xlu0 %1674
        %v1678 = vsel %vm613, %v1670, 0
        %1680 = vmatprep.subr.bf16.mxu0 0
        %1681 = vmatpush1.bf16.msra.mxu0 %v1675
        %1682 = vmatprep.subr.bf16.mxu0 0
        %1683 = vmatpush1.bf16.msra.mxu0 0
        %1684 = vmatprep.subr.bf16.mxu0 0
        %1685 = vmatpush1.bf16.msra.mxu0 0
        %1686 = vmatprep.subr.bf16.mxu0 0
        %1687 = vmatpush1.bf16.msra.mxu0 0
        %1688 = vmatprep.subr.bf16.mxu0 0
        %1689 = vmatpush1.bf16.msra.mxu0 0
        %1690 = vmatprep.subr.bf16.mxu0 0
        %1691 = vmatpush1.bf16.msra.mxu0 0
        %1692 = vmatprep.subr.bf16.mxu0 0
        %1693 = vmatpush1.bf16.msra.mxu0 0
        %1694 = vmatprep.subr.bf16.mxu0 0
        %1695 = vmatpush1.bf16.msra.mxu0 0
        %1696 = vmatprep.subr.bf16.mxu0 0
        %1697 = vmatpush1.bf16.msra.mxu0 0
        %1698 = vmatprep.subr.bf16.mxu0 0
        %1699 = vmatpush1.bf16.msra.mxu0 0
        %1700 = vmatprep.subr.bf16.mxu0 0
        %1701 = vmatpush1.bf16.msra.mxu0 0
        %1702 = vmatprep.subr.bf16.mxu0 0
        %1703 = vmatpush1.bf16.msra.mxu0 0
        %1704 = vmatprep.subr.bf16.mxu0 0
        %1705 = vmatpush1.bf16.msra.mxu0 0
        %1706 = vmatprep.subr.bf16.mxu0 0
        %1707 = vmatpush1.bf16.msra.mxu0 0
        %1708 = vmatprep.subr.bf16.mxu0 0
        %1709 = vmatpush1.bf16.msra.mxu0 0
        %1710 = vmatprep.subr.bf16.mxu0 0
        %1711 = vmatpush1.bf16.msra.mxu0 0
        %1712 = vmatprep.mubr.bf16.mxu0 0
        %1713 = vmatmul.mubr.bf16.gmra.mrb[0].mxu0 %v1678
        %v1714 = vpop.f32.mrb[0].mxu0
        %v1715 = vadd.f32 0.0, %v1714
        %v1716 = vpop.f32.mrb[0].mxu0
        %v1717 = vpop.f32.mrb[0].mxu0
        %v1718 = vadd.f32 0.0, %v1717
        %v1719 = vpop.f32.mrb[0].mxu0
        %1720 = vdwg.mxu0
        %1721 = vrot.lane.b32.xlu0 %v401, 48
        %v1722 = vpop.permute.xlu0 %1721
        %v1725 = vsel %vm613, %v1671, 0
        %1727 = vmatprep.subr.bf16.mxu0 0
        %1728 = vmatpush1.bf16.msra.mxu0 %v1722
        %1729 = vmatprep.subr.bf16.mxu0 0
        %1730 = vmatpush1.bf16.msra.mxu0 0
        %1731 = vmatprep.subr.bf16.mxu0 0
        %1732 = vmatpush1.bf16.msra.mxu0 0
        %1733 = vmatprep.subr.bf16.mxu0 0
        %1734 = vmatpush1.bf16.msra.mxu0 0
        %1735 = vmatprep.subr.bf16.mxu0 0
        %1736 = vmatpush1.bf16.msra.mxu0 0
        %1737 = vmatprep.subr.bf16.mxu0 0
        %1738 = vmatpush1.bf16.msra.mxu0 0
        %1739 = vmatprep.subr.bf16.mxu0 0
        %1740 = vmatpush1.bf16.msra.mxu0 0
        %1741 = vmatprep.subr.bf16.mxu0 0
        %1742 = vmatpush1.bf16.msra.mxu0 0
        %1743 = vmatprep.subr.bf16.mxu0 0
        %1744 = vmatpush1.bf16.msra.mxu0 0
        %1745 = vmatprep.subr.bf16.mxu0 0
        %1746 = vmatpush1.bf16.msra.mxu0 0
        %1747 = vmatprep.subr.bf16.mxu0 0
        %1748 = vmatpush1.bf16.msra.mxu0 0
        %1749 = vmatprep.subr.bf16.mxu0 0
        %1750 = vmatpush1.bf16.msra.mxu0 0
        %1751 = vmatprep.subr.bf16.mxu0 0
        %1752 = vmatpush1.bf16.msra.mxu0 0
        %1753 = vmatprep.subr.bf16.mxu0 0
        %1754 = vmatpush1.bf16.msra.mxu0 0
        %1755 = vmatprep.subr.bf16.mxu0 0
        %1756 = vmatpush1.bf16.msra.mxu0 0
        %1757 = vmatprep.subr.bf16.mxu0 0
        %1758 = vmatpush1.bf16.msra.mxu0 0
        %1759 = vmatprep.mubr.bf16.mxu0 0
        %1760 = vmatmul.mubr.bf16.gmra.mrb[0].mxu0 %v1725
        %v1761 = vpop.f32.mrb[0].mxu0
        %v1762 = vadd.f32 0.0, %v1761
        %v1763 = vpop.f32.mrb[0].mxu0
        %v1764 = vpop.f32.mrb[0].mxu0
        %v1765 = vadd.f32 0.0, %v1764
        %v1766 = vpop.f32.mrb[0].mxu0
        %1767 = vdwg.mxu0
        %1768 = vrot.lane.b32.xlu0 %v402, 48
        %v1769 = vpop.permute.xlu0 %1768
        %v1772 = vsel %vm613, %v1672, 0
        %1774 = vmatprep.subr.bf16.mxu0 0
        %1775 = vmatpush1.bf16.msra.mxu0 %v1769
        %1776 = vmatprep.subr.bf16.mxu0 0
        %1777 = vmatpush1.bf16.msra.mxu0 0
        %1778 = vmatprep.subr.bf16.mxu0 0
        %1779 = vmatpush1.bf16.msra.mxu0 0
        %1780 = vmatprep.subr.bf16.mxu0 0
        %1781 = vmatpush1.bf16.msra.mxu0 0
        %1782 = vmatprep.subr.bf16.mxu0 0
        %1783 = vmatpush1.bf16.msra.mxu0 0
        %1784 = vmatprep.subr.bf16.mxu0 0
        %1785 = vmatpush1.bf16.msra.mxu0 0
        %1786 = vmatprep.subr.bf16.mxu0 0
        %1787 = vmatpush1.bf16.msra.mxu0 0
        %1788 = vmatprep.subr.bf16.mxu0 0
        %1789 = vmatpush1.bf16.msra.mxu0 0
        %1790 = vmatprep.subr.bf16.mxu0 0
        %1791 = vmatpush1.bf16.msra.mxu0 0
        %1792 = vmatprep.subr.bf16.mxu0 0
        %1793 = vmatpush1.bf16.msra.mxu0 0
        %1794 = vmatprep.subr.bf16.mxu0 0
        %1795 = vmatpush1.bf16.msra.mxu0 0
        %1796 = vmatprep.subr.bf16.mxu0 0
        %1797 = vmatpush1.bf16.msra.mxu0 0
        %1798 = vmatprep.subr.bf16.mxu0 0
        %1799 = vmatpush1.bf16.msra.mxu0 0
        %1800 = vmatprep.subr.bf16.mxu0 0
        %1801 = vmatpush1.bf16.msra.mxu0 0
        %1802 = vmatprep.subr.bf16.mxu0 0
        %1803 = vmatpush1.bf16.msra.mxu0 0
        %1804 = vmatprep.subr.bf16.mxu0 0
        %1805 = vmatpush1.bf16.msra.mxu0 0
        %1806 = vmatprep.mubr.bf16.mxu0 0
        %1807 = vmatmul.mubr.bf16.gmra.mrb[0].mxu0 %v1772
        %v1808 = vpop.f32.mrb[0].mxu0
        %v1809 = vadd.f32 0.0, %v1808
        %v1810 = vpop.f32.mrb[0].mxu0
        %v1811 = vpop.f32.mrb[0].mxu0
        %v1812 = vadd.f32 0.0, %v1811
        %v1813 = vpop.f32.mrb[0].mxu0
        %1814 = vdwg.mxu0
        %1815 = vrot.lane.b32.xlu0 %v403, 48
        %v1816 = vpop.permute.xlu0 %1815
        %v1819 = vsel %vm613, %v1673, 0
        %1821 = vmatprep.subr.bf16.mxu0 0
        %1822 = vmatpush1.bf16.msra.mxu0 %v1816
        %1823 = vmatprep.subr.bf16.mxu0 0
        %1824 = vmatpush1.bf16.msra.mxu0 0
        %1825 = vmatprep.subr.bf16.mxu0 0
        %1826 = vmatpush1.bf16.msra.mxu0 0
        %1827 = vmatprep.subr.bf16.mxu0 0
        %1828 = vmatpush1.bf16.msra.mxu0 0
        %1829 = vmatprep.subr.bf16.mxu0 0
        %1830 = vmatpush1.bf16.msra.mxu0 0
        %1831 = vmatprep.subr.bf16.mxu0 0
        %1832 = vmatpush1.bf16.msra.mxu0 0
        %1833 = vmatprep.subr.bf16.mxu0 0
        %1834 = vmatpush1.bf16.msra.mxu0 0
        %1835 = vmatprep.subr.bf16.mxu0 0
        %1836 = vmatpush1.bf16.msra.mxu0 0
        %1837 = vmatprep.subr.bf16.mxu0 0
        %1838 = vmatpush1.bf16.msra.mxu0 0
        %1839 = vmatprep.subr.bf16.mxu0 0
        %1840 = vmatpush1.bf16.msra.mxu0 0
        %1841 = vmatprep.subr.bf16.mxu0 0
        %1842 = vmatpush1.bf16.msra.mxu0 0
        %1843 = vmatprep.subr.bf16.mxu0 0
        %1844 = vmatpush1.bf16.msra.mxu0 0
        %1845 = vmatprep.subr.bf16.mxu0 0
        %1846 = vmatpush1.bf16.msra.mxu0 0
        %1847 = vmatprep.subr.bf16.mxu0 0
        %1848 = vmatpush1.bf16.msra.mxu0 0
        %1849 = vmatprep.subr.bf16.mxu0 0
        %1850 = vmatpush1.bf16.msra.mxu0 0
        %1851 = vmatprep.subr.bf16.mxu0 0
        %1852 = vmatpush1.bf16.msra.mxu0 0
        %1853 = vmatprep.mubr.bf16.mxu0 0
        %1854 = vmatmul.mubr.bf16.gmra.mrb[0].mxu0 %v1819
        %v1855 = vpop.f32.mrb[0].mxu0
        %v1856 = vadd.f32 0.0, %v1855
        %v1857 = vpop.f32.mrb[0].mxu0
        %v1858 = vpop.f32.mrb[0].mxu0
        %v1859 = vadd.f32 0.0, %v1858
        %v1860 = vpop.f32.mrb[0].mxu0
        %1861 = vdwg.mxu0
        %1862 = vrot.lane.b32.xlu0 %v400, 104
        %v1863 = vpop.permute.xlu0 %1862
        %1864 = vrot.lane.b32.xlu0 %v400, 72
        %v1865 = vpop.permute.xlu0 %1864
        %v1867 = vsel %vm415, %v1863, 0
        %v1870 = vsel %vm415, %v1865, 0
        %1872 = vmatprep.subr.bf16.mxu0 0
        %1873 = vmatpush1.bf16.xpose.msra.mxu0 %v1870
        %1874 = vmatprep.subr.bf16.mxu0 0
        %1875 = vmatpush1.bf16.xpose.msra.mxu0 0
        %1876 = vmatprep.subr.bf16.mxu0 0
        %1877 = vmatpush1.bf16.xpose.msra.mxu0 0
        %1878 = vmatprep.subr.bf16.mxu0 0
        %1879 = vmatpush1.bf16.xpose.msra.mxu0 0
        %1880 = vmatprep.subr.bf16.mxu0 0
        %1881 = vmatpush1.bf16.xpose.msra.mxu0 0
        %1882 = vmatprep.subr.bf16.mxu0 0
        %1883 = vmatpush1.bf16.xpose.msra.mxu0 0
        %1884 = vmatprep.subr.bf16.mxu0 0
        %1885 = vmatpush1.bf16.xpose.msra.mxu0 0
        %1886 = vmatprep.subr.bf16.mxu0 0
        %1887 = vmatpush1.bf16.xpose.msra.mxu0 0
        %1888 = vmatprep.subr.bf16.mxu0 0
        %1889 = vmatpush1.bf16.xpose.msra.mxu0 0
        %1890 = vmatprep.subr.bf16.mxu0 0
        %1891 = vmatpush1.bf16.xpose.msra.mxu0 0
        %1892 = vmatprep.subr.bf16.mxu0 0
        %1893 = vmatpush1.bf16.xpose.msra.mxu0 0
        %1894 = vmatprep.subr.bf16.mxu0 0
        %1895 = vmatpush1.bf16.xpose.msra.mxu0 0
        %1896 = vmatprep.subr.bf16.mxu0 0
        %1897 = vmatpush1.bf16.xpose.msra.mxu0 0
        %1898 = vmatprep.subr.bf16.mxu0 0
        %1899 = vmatpush1.bf16.xpose.msra.mxu0 0
        %1900 = vmatprep.subr.bf16.mxu0 0
        %1901 = vmatpush1.bf16.xpose.msra.mxu0 0
        %1902 = vmatprep.subr.bf16.mxu0 0
        %1903 = vmatpush1.bf16.xpose.msra.mxu0 0
        %1904 = vmatprep.mubr.bf16.mxu0 0
        %1905 = vmatmul.mubr.bf16.gmra.mrb[0].mxu0 %v1867
        %v1906 = vpop.f32.mrb[0].mxu0
        %v1907 = vadd.f32 %v410, %v1906
        %v1908 = vpop.f32.mrb[0].mxu0
        %v1909 = vpop.f32.mrb[0].mxu0
        %v1910 = vadd.f32 %v411, %v1909
        %v1911 = vpop.f32.mrb[0].mxu0
        %1912 = vdwg.mxu0
        %1913 = vrot.lane.b32.xlu0 %v401, 104
        %v1914 = vpop.permute.xlu0 %1913
        %1915 = vrot.lane.b32.xlu0 %v401, 72
        %v1916 = vpop.permute.xlu0 %1915
        %v1918 = vsel %vm415, %v1914, 0
        %v1921 = vsel %vm415, %v1916, 0
        %1923 = vmatprep.subr.bf16.mxu0 0
        %1924 = vmatpush1.bf16.xpose.msra.mxu0 %v1921
        %1925 = vmatprep.subr.bf16.mxu0 0
        %1926 = vmatpush1.bf16.xpose.msra.mxu0 0
        %1927 = vmatprep.subr.bf16.mxu0 0
        %1928 = vmatpush1.bf16.xpose.msra.mxu0 0
        %1929 = vmatprep.subr.bf16.mxu0 0
        %1930 = vmatpush1.bf16.xpose.msra.mxu0 0
        %1931 = vmatprep.subr.bf16.mxu0 0
        %1932 = vmatpush1.bf16.xpose.msra.mxu0 0
        %1933 = vmatprep.subr.bf16.mxu0 0
        %1934 = vmatpush1.bf16.xpose.msra.mxu0 0
        %1935 = vmatprep.subr.bf16.mxu0 0
        %1936 = vmatpush1.bf16.xpose.msra.mxu0 0
        %1937 = vmatprep.subr.bf16.mxu0 0
        %1938 = vmatpush1.bf16.xpose.msra.mxu0 0
        %1939 = vmatprep.subr.bf16.mxu0 0
        %1940 = vmatpush1.bf16.xpose.msra.mxu0 0
        %1941 = vmatprep.subr.bf16.mxu0 0
        %1942 = vmatpush1.bf16.xpose.msra.mxu0 0
        %1943 = vmatprep.subr.bf16.mxu0 0
        %1944 = vmatpush1.bf16.xpose.msra.mxu0 0
        %1945 = vmatprep.subr.bf16.mxu0 0
        %1946 = vmatpush1.bf16.xpose.msra.mxu0 0
        %1947 = vmatprep.subr.bf16.mxu0 0
        %1948 = vmatpush1.bf16.xpose.msra.mxu0 0
        %1949 = vmatprep.subr.bf16.mxu0 0
        %1950 = vmatpush1.bf16.xpose.msra.mxu0 0
        %1951 = vmatprep.subr.bf16.mxu0 0
        %1952 = vmatpush1.bf16.xpose.msra.mxu0 0
        %1953 = vmatprep.subr.bf16.mxu0 0
        %1954 = vmatpush1.bf16.xpose.msra.mxu0 0
        %1955 = vmatprep.mubr.bf16.mxu0 0
        %1956 = vmatmul.mubr.bf16.gmra.mrb[0].mxu0 %v1918
        %v1957 = vpop.f32.mrb[0].mxu0
        %v1958 = vadd.f32 %v410, %v1957
        %v1959 = vpop.f32.mrb[0].mxu0
        %v1960 = vpop.f32.mrb[0].mxu0
        %v1961 = vadd.f32 %v411, %v1960
        %v1962 = vpop.f32.mrb[0].mxu0
        %1963 = vdwg.mxu0
        %1964 = vrot.lane.b32.xlu0 %v402, 104
        %v1965 = vpop.permute.xlu0 %1964
        %1966 = vrot.lane.b32.xlu0 %v402, 72
        %v1967 = vpop.permute.xlu0 %1966
        %v1969 = vsel %vm415, %v1965, 0
        %v1972 = vsel %vm415, %v1967, 0
        %1974 = vmatprep.subr.bf16.mxu0 0
        %1975 = vmatpush1.bf16.xpose.msra.mxu0 %v1972
        %1976 = vmatprep.subr.bf16.mxu0 0
        %1977 = vmatpush1.bf16.xpose.msra.mxu0 0
        %1978 = vmatprep.subr.bf16.mxu0 0
        %1979 = vmatpush1.bf16.xpose.msra.mxu0 0
        %1980 = vmatprep.subr.bf16.mxu0 0
        %1981 = vmatpush1.bf16.xpose.msra.mxu0 0
        %1982 = vmatprep.subr.bf16.mxu0 0
        %1983 = vmatpush1.bf16.xpose.msra.mxu0 0
        %1984 = vmatprep.subr.bf16.mxu0 0
        %1985 = vmatpush1.bf16.xpose.msra.mxu0 0
        %1986 = vmatprep.subr.bf16.mxu0 0
        %1987 = vmatpush1.bf16.xpose.msra.mxu0 0
        %1988 = vmatprep.subr.bf16.mxu0 0
        %1989 = vmatpush1.bf16.xpose.msra.mxu0 0
        %1990 = vmatprep.subr.bf16.mxu0 0
        %1991 = vmatpush1.bf16.xpose.msra.mxu0 0
        %1992 = vmatprep.subr.bf16.mxu0 0
        %1993 = vmatpush1.bf16.xpose.msra.mxu0 0
        %1994 = vmatprep.subr.bf16.mxu0 0
        %1995 = vmatpush1.bf16.xpose.msra.mxu0 0
        %1996 = vmatprep.subr.bf16.mxu0 0
        %1997 = vmatpush1.bf16.xpose.msra.mxu0 0
        %1998 = vmatprep.subr.bf16.mxu0 0
        %1999 = vmatpush1.bf16.xpose.msra.mxu0 0
        %2000 = vmatprep.subr.bf16.mxu0 0
        %2001 = vmatpush1.bf16.xpose.msra.mxu0 0
        %2002 = vmatprep.subr.bf16.mxu0 0
        %2003 = vmatpush1.bf16.xpose.msra.mxu0 0
        %2004 = vmatprep.subr.bf16.mxu0 0
        %2005 = vmatpush1.bf16.xpose.msra.mxu0 0
        %2006 = vmatprep.mubr.bf16.mxu0 0
        %2007 = vmatmul.mubr.bf16.gmra.mrb[0].mxu0 %v1969
        %v2008 = vpop.f32.mrb[0].mxu0
        %v2009 = vadd.f32 %v410, %v2008
        %v2010 = vpop.f32.mrb[0].mxu0
        %v2011 = vpop.f32.mrb[0].mxu0
        %v2012 = vadd.f32 %v411, %v2011
        %v2013 = vpop.f32.mrb[0].mxu0
        %2014 = vdwg.mxu0
        %2015 = vrot.lane.b32.xlu0 %v403, 104
        %v2016 = vpop.permute.xlu0 %2015
        %2017 = vrot.lane.b32.xlu0 %v403, 72
        %v2018 = vpop.permute.xlu0 %2017
        %v2020 = vsel %vm415, %v2016, 0
        %v2023 = vsel %vm415, %v2018, 0
        %2025 = vmatprep.subr.bf16.mxu0 0
        %2026 = vmatpush1.bf16.xpose.msra.mxu0 %v2023
        %2027 = vmatprep.subr.bf16.mxu0 0
        %2028 = vmatpush1.bf16.xpose.msra.mxu0 0
        %2029 = vmatprep.subr.bf16.mxu0 0
        %2030 = vmatpush1.bf16.xpose.msra.mxu0 0
        %2031 = vmatprep.subr.bf16.mxu0 0
        %2032 = vmatpush1.bf16.xpose.msra.mxu0 0
        %2033 = vmatprep.subr.bf16.mxu0 0
        %2034 = vmatpush1.bf16.xpose.msra.mxu0 0
        %2035 = vmatprep.subr.bf16.mxu0 0
        %2036 = vmatpush1.bf16.xpose.msra.mxu0 0
        %2037 = vmatprep.subr.bf16.mxu0 0
        %2038 = vmatpush1.bf16.xpose.msra.mxu0 0
        %2039 = vmatprep.subr.bf16.mxu0 0
        %2040 = vmatpush1.bf16.xpose.msra.mxu0 0
        %2041 = vmatprep.subr.bf16.mxu0 0
        %2042 = vmatpush1.bf16.xpose.msra.mxu0 0
        %2043 = vmatprep.subr.bf16.mxu0 0
        %2044 = vmatpush1.bf16.xpose.msra.mxu0 0
        %2045 = vmatprep.subr.bf16.mxu0 0
        %2046 = vmatpush1.bf16.xpose.msra.mxu0 0
        %2047 = vmatprep.subr.bf16.mxu0 0
        %2048 = vmatpush1.bf16.xpose.msra.mxu0 0
        %2049 = vmatprep.subr.bf16.mxu0 0
        %2050 = vmatpush1.bf16.xpose.msra.mxu0 0
        %2051 = vmatprep.subr.bf16.mxu0 0
        %2052 = vmatpush1.bf16.xpose.msra.mxu0 0
        %2053 = vmatprep.subr.bf16.mxu0 0
        %2054 = vmatpush1.bf16.xpose.msra.mxu0 0
        %2055 = vmatprep.subr.bf16.mxu0 0
        %2056 = vmatpush1.bf16.xpose.msra.mxu0 0
        %2057 = vmatprep.mubr.bf16.mxu0 0
        %2058 = vmatmul.mubr.bf16.gmra.mrb[0].mxu0 %v2020
        %v2059 = vpop.f32.mrb[0].mxu0
        %v2060 = vadd.f32 %v410, %v2059
        %v2061 = vpop.f32.mrb[0].mxu0
        %v2062 = vpop.f32.mrb[0].mxu0
        %v2063 = vadd.f32 %v411, %v2062
        %v2064 = vpop.f32.mrb[0].mxu0
        %2065 = vdwg.mxu0
        %v2066 = vsel %vm613, %v1907, -inf
        %2067 = vmax.xlane.f32.xlu0 %v2066
        %v2068 = vpop.xlane.xlu0 %2067
        %v2069 = vsel %vm613, %v1910, -inf
        %2070 = vmax.xlane.f32.xlu0 %v2069
        %v2071 = vpop.xlane.xlu0 %2070
        %v2072 = vsel %vm613, %v1958, -inf
        %2073 = vmax.xlane.f32.xlu0 %v2072
        %v2074 = vpop.xlane.xlu0 %2073
        %v2075 = vsel %vm613, %v1961, -inf
        %2076 = vmax.xlane.f32.xlu0 %v2075
        %v2077 = vpop.xlane.xlu0 %2076
        %v2078 = vsel %vm613, %v2009, -inf
        %2079 = vmax.xlane.f32.xlu0 %v2078
        %v2080 = vpop.xlane.xlu0 %2079
        %v2081 = vsel %vm613, %v2012, -inf
        %2082 = vmax.xlane.f32.xlu0 %v2081
        %v2083 = vpop.xlane.xlu0 %2082
        %v2084 = vsel %vm613, %v2060, -inf
        %2085 = vmax.xlane.f32.xlu0 %v2084
        %v2086 = vpop.xlane.xlu0 %2085
        %v2087 = vsel %vm613, %v2063, -inf
        %2088 = vmax.xlane.f32.xlu0 %v2087
        %v2089 = vpop.xlane.xlu0 %2088
        %v2090 = vsub.f32 %v1907, %v2068
        %v2091 = vsub.f32 %v1910, %v2071
        %v2092 = vsub.f32 %v1958, %v2074
        %v2093 = vsub.f32 %v1961, %v2077
        %v2094 = vsub.f32 %v2009, %v2080
        %v2095 = vsub.f32 %v2012, %v2083
        %v2096 = vsub.f32 %v2060, %v2086
        %v2097 = vsub.f32 %v2063, %v2089
        %v2098 = vmul.f32 %v2090, 1.442695
        %v2099 = vpow.pop %v2098
        %v2100 = vmul.f32 %v2091, 1.442695
        %v2101 = vpow.pop %v2100
        %v2102 = vmul.f32 %v2092, 1.442695
        %v2103 = vpow.pop %v2102
        %v2104 = vmul.f32 %v2093, 1.442695
        %v2105 = vpow.pop %v2104
        %v2106 = vmul.f32 %v2094, 1.442695
        %v2107 = vpow.pop %v2106
        %v2108 = vmul.f32 %v2095, 1.442695
        %v2109 = vpow.pop %v2108
        %v2110 = vmul.f32 %v2096, 1.442695
        %v2111 = vpow.pop %v2110
        %v2112 = vmul.f32 %v2097, 1.442695
        %v2113 = vpow.pop %v2112
        %v2114 = vsel %vm613, %v2099, 0.0
        %2115 = vadd.xlane.f32.xlu0 %v2114
        %v2116 = vpop.xlane.xlu0 %2115
        %v2117 = vsel %vm613, %v2101, 0.0
        %2118 = vadd.xlane.f32.xlu0 %v2117
        %v2119 = vpop.xlane.xlu0 %2118
        %v2120 = vsel %vm613, %v2103, 0.0
        %2121 = vadd.xlane.f32.xlu0 %v2120
        %v2122 = vpop.xlane.xlu0 %2121
        %v2123 = vsel %vm613, %v2105, 0.0
        %2124 = vadd.xlane.f32.xlu0 %v2123
        %v2125 = vpop.xlane.xlu0 %2124
        %v2126 = vsel %vm613, %v2107, 0.0
        %2127 = vadd.xlane.f32.xlu0 %v2126
        %v2128 = vpop.xlane.xlu0 %2127
        %v2129 = vsel %vm613, %v2109, 0.0
        %2130 = vadd.xlane.f32.xlu0 %v2129
        %v2131 = vpop.xlane.xlu0 %2130
        %v2132 = vsel %vm613, %v2111, 0.0
        %2133 = vadd.xlane.f32.xlu0 %v2132
        %v2134 = vpop.xlane.xlu0 %2133
        %v2135 = vsel %vm613, %v2113, 0.0
        %2136 = vadd.xlane.f32.xlu0 %v2135
        %v2137 = vpop.xlane.xlu0 %2136
        %v2138 = vrcp.pop %v2116
        %v2139 = vrcp.pop %v2119
        %v2140 = vrcp.pop %v2122
        %v2141 = vrcp.pop %v2125
        %v2142 = vrcp.pop %v2128
        %v2143 = vrcp.pop %v2131
        %v2144 = vrcp.pop %v2134
        %v2145 = vrcp.pop %v2137
        %v2146 = vmul.f32 %v2099, %v2138
        %v2147 = vmul.f32 %v2101, %v2139
        %v2148 = vmul.f32 %v2103, %v2140
        %v2149 = vmul.f32 %v2105, %v2141
        %v2150 = vmul.f32 %v2107, %v2142
        %v2151 = vmul.f32 %v2109, %v2143
        %v2152 = vmul.f32 %v2111, %v2144
        %v2153 = vmul.f32 %v2113, %v2145
        %v2154 = vpack.c.bf16 %v2147, %v2146
        %v2155 = vpack.c.bf16 %v2149, %v2148
        %v2156 = vpack.c.bf16 %v2151, %v2150
        %v2157 = vpack.c.bf16 %v2153, %v2152
        %2158 = vrot.lane.b32.xlu0 %v400, 40
        %v2159 = vpop.permute.xlu0 %2158
        %v2162 = vsel %vm613, %v2154, 0
        %2164 = vmatprep.subr.bf16.mxu0 0
        %2165 = vmatpush1.bf16.msra.mxu0 %v2159
        %2166 = vmatprep.subr.bf16.mxu0 0
        %2167 = vmatpush1.bf16.msra.mxu0 0
        %2168 = vmatprep.subr.bf16.mxu0 0
        %2169 = vmatpush1.bf16.msra.mxu0 0
        %2170 = vmatprep.subr.bf16.mxu0 0
        %2171 = vmatpush1.bf16.msra.mxu0 0
        %2172 = vmatprep.subr.bf16.mxu0 0
        %2173 = vmatpush1.bf16.msra.mxu0 0
        %2174 = vmatprep.subr.bf16.mxu0 0
        %2175 = vmatpush1.bf16.msra.mxu0 0
        %2176 = vmatprep.subr.bf16.mxu0 0
        %2177 = vmatpush1.bf16.msra.mxu0 0
        %2178 = vmatprep.subr.bf16.mxu0 0
        %2179 = vmatpush1.bf16.msra.mxu0 0
        %2180 = vmatprep.subr.bf16.mxu0 0
        %2181 = vmatpush1.bf16.msra.mxu0 0
        %2182 = vmatprep.subr.bf16.mxu0 0
        %2183 = vmatpush1.bf16.msra.mxu0 0
        %2184 = vmatprep.subr.bf16.mxu0 0
        %2185 = vmatpush1.bf16.msra.mxu0 0
        %2186 = vmatprep.subr.bf16.mxu0 0
        %2187 = vmatpush1.bf16.msra.mxu0 0
        %2188 = vmatprep.subr.bf16.mxu0 0
        %2189 = vmatpush1.bf16.msra.mxu0 0
        %2190 = vmatprep.subr.bf16.mxu0 0
        %2191 = vmatpush1.bf16.msra.mxu0 0
        %2192 = vmatprep.subr.bf16.mxu0 0
        %2193 = vmatpush1.bf16.msra.mxu0 0
        %2194 = vmatprep.subr.bf16.mxu0 0
        %2195 = vmatpush1.bf16.msra.mxu0 0
        %2196 = vmatprep.mubr.bf16.mxu0 0
        %2197 = vmatmul.mubr.bf16.gmra.mrb[0].mxu0 %v2162
        %v2198 = vpop.f32.mrb[0].mxu0
        %v2199 = vadd.f32 0.0, %v2198
        %v2200 = vpop.f32.mrb[0].mxu0
        %v2201 = vpop.f32.mrb[0].mxu0
        %v2202 = vadd.f32 0.0, %v2201
        %v2203 = vpop.f32.mrb[0].mxu0
        %2204 = vdwg.mxu0
        %2205 = vrot.lane.b32.xlu0 %v401, 40
        %v2206 = vpop.permute.xlu0 %2205
        %v2209 = vsel %vm613, %v2155, 0
        %2211 = vmatprep.subr.bf16.mxu0 0
        %2212 = vmatpush1.bf16.msra.mxu0 %v2206
        %2213 = vmatprep.subr.bf16.mxu0 0
        %2214 = vmatpush1.bf16.msra.mxu0 0
        %2215 = vmatprep.subr.bf16.mxu0 0
        %2216 = vmatpush1.bf16.msra.mxu0 0
        %2217 = vmatprep.subr.bf16.mxu0 0
        %2218 = vmatpush1.bf16.msra.mxu0 0
        %2219 = vmatprep.subr.bf16.mxu0 0
        %2220 = vmatpush1.bf16.msra.mxu0 0
        %2221 = vmatprep.subr.bf16.mxu0 0
        %2222 = vmatpush1.bf16.msra.mxu0 0
        %2223 = vmatprep.subr.bf16.mxu0 0
        %2224 = vmatpush1.bf16.msra.mxu0 0
        %2225 = vmatprep.subr.bf16.mxu0 0
        %2226 = vmatpush1.bf16.msra.mxu0 0
        %2227 = vmatprep.subr.bf16.mxu0 0
        %2228 = vmatpush1.bf16.msra.mxu0 0
        %2229 = vmatprep.subr.bf16.mxu0 0
        %2230 = vmatpush1.bf16.msra.mxu0 0
        %2231 = vmatprep.subr.bf16.mxu0 0
        %2232 = vmatpush1.bf16.msra.mxu0 0
        %2233 = vmatprep.subr.bf16.mxu0 0
        %2234 = vmatpush1.bf16.msra.mxu0 0
        %2235 = vmatprep.subr.bf16.mxu0 0
        %2236 = vmatpush1.bf16.msra.mxu0 0
        %2237 = vmatprep.subr.bf16.mxu0 0
        %2238 = vmatpush1.bf16.msra.mxu0 0
        %2239 = vmatprep.subr.bf16.mxu0 0
        %2240 = vmatpush1.bf16.msra.mxu0 0
        %2241 = vmatprep.subr.bf16.mxu0 0
        %2242 = vmatpush1.bf16.msra.mxu0 0
        %2243 = vmatprep.mubr.bf16.mxu0 0
        %2244 = vmatmul.mubr.bf16.gmra.mrb[0].mxu0 %v2209
        %v2245 = vpop.f32.mrb[0].mxu0
        %v2246 = vadd.f32 0.0, %v2245
        %v2247 = vpop.f32.mrb[0].mxu0
        %v2248 = vpop.f32.mrb[0].mxu0
        %v2249 = vadd.f32 0.0, %v2248
        %v2250 = vpop.f32.mrb[0].mxu0
        %2251 = vdwg.mxu0
        %2252 = vrot.lane.b32.xlu0 %v402, 40
        %v2253 = vpop.permute.xlu0 %2252
        %v2256 = vsel %vm613, %v2156, 0
        %2258 = vmatprep.subr.bf16.mxu0 0
        %2259 = vmatpush1.bf16.msra.mxu0 %v2253
        %2260 = vmatprep.subr.bf16.mxu0 0
        %2261 = vmatpush1.bf16.msra.mxu0 0
        %2262 = vmatprep.subr.bf16.mxu0 0
        %2263 = vmatpush1.bf16.msra.mxu0 0
        %2264 = vmatprep.subr.bf16.mxu0 0
        %2265 = vmatpush1.bf16.msra.mxu0 0
        %2266 = vmatprep.subr.bf16.mxu0 0
        %2267 = vmatpush1.bf16.msra.mxu0 0
        %2268 = vmatprep.subr.bf16.mxu0 0
        %2269 = vmatpush1.bf16.msra.mxu0 0
        %2270 = vmatprep.subr.bf16.mxu0 0
        %2271 = vmatpush1.bf16.msra.mxu0 0
        %2272 = vmatprep.subr.bf16.mxu0 0
        %2273 = vmatpush1.bf16.msra.mxu0 0
        %2274 = vmatprep.subr.bf16.mxu0 0
        %2275 = vmatpush1.bf16.msra.mxu0 0
        %2276 = vmatprep.subr.bf16.mxu0 0
        %2277 = vmatpush1.bf16.msra.mxu0 0
        %2278 = vmatprep.subr.bf16.mxu0 0
        %2279 = vmatpush1.bf16.msra.mxu0 0
        %2280 = vmatprep.subr.bf16.mxu0 0
        %2281 = vmatpush1.bf16.msra.mxu0 0
        %2282 = vmatprep.subr.bf16.mxu0 0
        %2283 = vmatpush1.bf16.msra.mxu0 0
        %2284 = vmatprep.subr.bf16.mxu0 0
        %2285 = vmatpush1.bf16.msra.mxu0 0
        %2286 = vmatprep.subr.bf16.mxu0 0
        %2287 = vmatpush1.bf16.msra.mxu0 0
        %2288 = vmatprep.subr.bf16.mxu0 0
        %2289 = vmatpush1.bf16.msra.mxu0 0
        %2290 = vmatprep.mubr.bf16.mxu0 0
        %2291 = vmatmul.mubr.bf16.gmra.mrb[0].mxu0 %v2256
        %v2292 = vpop.f32.mrb[0].mxu0
        %v2293 = vadd.f32 0.0, %v2292
        %v2294 = vpop.f32.mrb[0].mxu0
        %v2295 = vpop.f32.mrb[0].mxu0
        %v2296 = vadd.f32 0.0, %v2295
        %v2297 = vpop.f32.mrb[0].mxu0
        %2298 = vdwg.mxu0
        %2299 = vrot.lane.b32.xlu0 %v403, 40
        %v2300 = vpop.permute.xlu0 %2299
        %v2303 = vsel %vm613, %v2157, 0
        %2305 = vmatprep.subr.bf16.mxu0 0
        %2306 = vmatpush1.bf16.msra.mxu0 %v2300
        %2307 = vmatprep.subr.bf16.mxu0 0
        %2308 = vmatpush1.bf16.msra.mxu0 0
        %2309 = vmatprep.subr.bf16.mxu0 0
        %2310 = vmatpush1.bf16.msra.mxu0 0
        %2311 = vmatprep.subr.bf16.mxu0 0
        %2312 = vmatpush1.bf16.msra.mxu0 0
        %2313 = vmatprep.subr.bf16.mxu0 0
        %2314 = vmatpush1.bf16.msra.mxu0 0
        %2315 = vmatprep.subr.bf16.mxu0 0
        %2316 = vmatpush1.bf16.msra.mxu0 0
        %2317 = vmatprep.subr.bf16.mxu0 0
        %2318 = vmatpush1.bf16.msra.mxu0 0
        %2319 = vmatprep.subr.bf16.mxu0 0
        %2320 = vmatpush1.bf16.msra.mxu0 0
        %2321 = vmatprep.subr.bf16.mxu0 0
        %2322 = vmatpush1.bf16.msra.mxu0 0
        %2323 = vmatprep.subr.bf16.mxu0 0
        %2324 = vmatpush1.bf16.msra.mxu0 0
        %2325 = vmatprep.subr.bf16.mxu0 0
        %2326 = vmatpush1.bf16.msra.mxu0 0
        %2327 = vmatprep.subr.bf16.mxu0 0
        %2328 = vmatpush1.bf16.msra.mxu0 0
        %2329 = vmatprep.subr.bf16.mxu0 0
        %2330 = vmatpush1.bf16.msra.mxu0 0
        %2331 = vmatprep.subr.bf16.mxu0 0
        %2332 = vmatpush1.bf16.msra.mxu0 0
        %2333 = vmatprep.subr.bf16.mxu0 0
        %2334 = vmatpush1.bf16.msra.mxu0 0
        %2335 = vmatprep.subr.bf16.mxu0 0
        %2336 = vmatpush1.bf16.msra.mxu0 0
        %2337 = vmatprep.mubr.bf16.mxu0 0
        %2338 = vmatmul.mubr.bf16.gmra.mrb[0].mxu0 %v2303
        %v2339 = vpop.f32.mrb[0].mxu0
        %v2340 = vadd.f32 0.0, %v2339
        %v2341 = vpop.f32.mrb[0].mxu0
        %v2342 = vpop.f32.mrb[0].mxu0
        %v2343 = vadd.f32 0.0, %v2342
        %v2344 = vpop.f32.mrb[0].mxu0
        %2345 = vdwg.mxu0
        %2354 = vrot.lane.b32.xlu0 %v1231, 8
        %v2355 = vpop.permute.xlu0 %2354
        %2356 = vrot.lane.b32.xlu0 %v1234, 8
        %v2357 = vpop.permute.xlu0 %2356
        %2358 = vrot.lane.b32.xlu0 %v1278, 8
        %v2359 = vpop.permute.xlu0 %2358
        %2360 = vrot.lane.b32.xlu0 %v1281, 8
        %v2361 = vpop.permute.xlu0 %2360
        %2362 = vrot.lane.b32.xlu0 %v1325, 8
        %v2363 = vpop.permute.xlu0 %2362
        %2364 = vrot.lane.b32.xlu0 %v1328, 8
        %v2365 = vpop.permute.xlu0 %2364
        %2366 = vrot.lane.b32.xlu0 %v1372, 8
        %v2367 = vpop.permute.xlu0 %2366
        %2368 = vrot.lane.b32.xlu0 %v1375, 8
        %v2369 = vpop.permute.xlu0 %2368
        %2386 = vrot.lane.b32.xlu0 %v1715, 16
        %v2387 = vpop.permute.xlu0 %2386
        %2388 = vrot.lane.b32.xlu0 %v1718, 16
        %v2389 = vpop.permute.xlu0 %2388
        %2390 = vrot.lane.b32.xlu0 %v1762, 16
        %v2391 = vpop.permute.xlu0 %2390
        %2392 = vrot.lane.b32.xlu0 %v1765, 16
        %v2393 = vpop.permute.xlu0 %2392
        %2394 = vrot.lane.b32.xlu0 %v1809, 16
        %v2395 = vpop.permute.xlu0 %2394
        %2396 = vrot.lane.b32.xlu0 %v1812, 16
        %v2397 = vpop.permute.xlu0 %2396
        %2398 = vrot.lane.b32.xlu0 %v1856, 16
        %v2399 = vpop.permute.xlu0 %2398
        %2400 = vrot.lane.b32.xlu0 %v1859, 16
        %v2401 = vpop.permute.xlu0 %2400
        %2418 = vrot.lane.b32.xlu0 %v2199, 24
        %v2419 = vpop.permute.xlu0 %2418
        %2420 = vrot.lane.b32.xlu0 %v2202, 24
        %v2421 = vpop.permute.xlu0 %2420
        %2422 = vrot.lane.b32.xlu0 %v2246, 24
        %v2423 = vpop.permute.xlu0 %2422
        %2424 = vrot.lane.b32.xlu0 %v2249, 24
        %v2425 = vpop.permute.xlu0 %2424
        %2426 = vrot.lane.b32.xlu0 %v2293, 24
        %v2427 = vpop.permute.xlu0 %2426
        %2428 = vrot.lane.b32.xlu0 %v2296, 24
        %v2429 = vpop.permute.xlu0 %2428
        %2430 = vrot.lane.b32.xlu0 %v2340, 24
        %v2431 = vpop.permute.xlu0 %2430
        %2432 = vrot.lane.b32.xlu0 %v2343, 24
        %v2433 = vpop.permute.xlu0 %2432
        %v2442 = vsel %vm415, %v747, %v2355
        %v2443 = vsel %vm415, %v750, %v2357
        %v2444 = vsel %vm415, %v794, %v2359
        %v2445 = vsel %vm415, %v797, %v2361
        %v2446 = vsel %vm415, %v841, %v2363
        %v2447 = vsel %vm415, %v844, %v2365
        %v2448 = vsel %vm415, %v888, %v2367
        %v2449 = vsel %vm415, %v891, %v2369
        %v2450 = vsel %vm613, %v2442, %v2387
        %v2451 = vsel %vm613, %v2443, %v2389
        %v2452 = vsel %vm613, %v2444, %v2391
        %v2453 = vsel %vm613, %v2445, %v2393
        %v2454 = vsel %vm613, %v2446, %v2395
        %v2455 = vsel %vm613, %v2447, %v2397
        %v2456 = vsel %vm613, %v2448, %v2399
        %v2457 = vsel %vm613, %v2449, %v2401
        %vm2458 = vcmask 195584
        %v2459 = vsel %vm2458, %v2450, %v2419
        %v2460 = vsel %vm2458, %v2451, %v2421
        %v2461 = vsel %vm2458, %v2452, %v2423
        %v2462 = vsel %vm2458, %v2453, %v2425
        %v2463 = vsel %vm2458, %v2454, %v2427
        %v2464 = vsel %vm2458, %v2455, %v2429
        %v2465 = vsel %vm2458, %v2456, %v2431
        %v2466 = vsel %vm2458, %v2457, %v2433
        %v2467 = vpack.c.bf16 %v2460, %v2459
        %v2468 = vpack.c.bf16 %v2462, %v2461
        %v2469 = vpack.c.bf16 %v2464, %v2463
        %v2470 = vpack.c.bf16 %v2466, %v2465
        %v2471 = vld [vmem:[#allocation2] sm:$0xf]
        %v2472 = vld [vmem:[#allocation2 + $0x4] sm:$0xf]
        %v2473 = vld [vmem:[#allocation2 + $0x8] sm:$0xf]
        %v2474 = vld [vmem:[#allocation2 + $0xc] sm:$0xf]
        %v2475 = vld [vmem:[%s5] sm:$0x1]
        %v2477 = vlaneseq
        %v2478 = vshrl.u32 %v2477, 7
        %v2479 = vsub.s32 0, %v2478
        %v2480 = vrot.slane %v2475, %v2479
        %v2486 = vunpack.c.l.b16 %v2471
        %v2487 = vunpack.c.l.b16 %v2472
        %v2488 = vunpack.c.l.b16 %v2473
        %v2489 = vunpack.c.l.b16 %v2474
        %v2490 = vpack.c.b16 %v2487, %v2486
        %v2491 = vpack.c.b16 %v2489, %v2488
        %v2495 = vsel %vm322, %v2467, 0
        %v2498 = vsel %vm322, %v2468, 0
        %v2501 = vsel %vm322, %v2469, 0
        %v2504 = vsel %vm322, %v2470, 0
        %2506 = vmatprep.subr.bf16.mxu0 0
        %2507 = vmatpush1.bf16.msra.mxu0 %v2490
        %2508 = vmatprep.subr.bf16.mxu0 0
        %2509 = vmatpush1.bf16.msra.mxu0 %v2491
        %2510 = vmatprep.subr.bf16.mxu0 0
        %2511 = vmatpush1.bf16.msra.mxu0 0
        %2512 = vmatprep.subr.bf16.mxu0 0
        %2513 = vmatpush1.bf16.msra.mxu0 0
        %2514 = vmatprep.subr.bf16.mxu0 0
        %2515 = vmatpush1.bf16.msra.mxu0 0
        %2516 = vmatprep.subr.bf16.mxu0 0
        %2517 = vmatpush1.bf16.msra.mxu0 0
        %2518 = vmatprep.subr.bf16.mxu0 0
        %2519 = vmatpush1.bf16.msra.mxu0 0
        %2520 = vmatprep.subr.bf16.mxu0 0
        %2521 = vmatpush1.bf16.msra.mxu0 0
        %2522 = vmatprep.subr.bf16.mxu0 0
        %2523 = vmatpush1.bf16.msra.mxu0 0
        %2524 = vmatprep.subr.bf16.mxu0 0
        %2525 = vmatpush1.bf16.msra.mxu0 0
        %2526 = vmatprep.subr.bf16.mxu0 0
        %2527 = vmatpush1.bf16.msra.mxu0 0
        %2528 = vmatprep.subr.bf16.mxu0 0
        %2529 = vmatpush1.bf16.msra.mxu0 0
        %2530 = vmatprep.subr.bf16.mxu0 0
        %2531 = vmatpush1.bf16.msra.mxu0 0
        %2532 = vmatprep.subr.bf16.mxu0 0
        %2533 = vmatpush1.bf16.msra.mxu0 0
        %2534 = vmatprep.subr.bf16.mxu0 0
        %2535 = vmatpush1.bf16.msra.mxu0 0
        %2536 = vmatprep.subr.bf16.mxu0 0
        %2537 = vmatpush1.bf16.msra.mxu0 0
        %2538 = vmatprep.mubr.bf16.mxu0 0
        %2539 = vmatmul.mubr.bf16.gmra.mrb[0].mxu0 %v2495
        %v2540 = vpop.f32.mrb[0].mxu0
        %v2541 = vadd.f32 %v2480, %v2540
        %v2542 = vpop.f32.mrb[0].mxu0
        %v2543 = vpop.f32.mrb[0].mxu0
        %v2544 = vadd.f32 %v2480, %v2543
        %v2545 = vpop.f32.mrb[0].mxu0
        %2546 = vmatprep.mubr.bf16.mxu0 0
        %2547 = vmatmul.mubr.bf16.gmra.mrb[0].mxu0 %v2498
        %v2548 = vpop.f32.mrb[0].mxu0
        %v2549 = vadd.f32 %v2480, %v2548
        %v2550 = vpop.f32.mrb[0].mxu0
        %v2551 = vpop.f32.mrb[0].mxu0
        %v2552 = vadd.f32 %v2480, %v2551
        %v2553 = vpop.f32.mrb[0].mxu0
        %2554 = vmatprep.mubr.bf16.mxu0 0
        %2555 = vmatmul.mubr.bf16.gmra.mrb[0].mxu0 %v2501
        %v2556 = vpop.f32.mrb[0].mxu0
        %v2557 = vadd.f32 %v2480, %v2556
        %v2558 = vpop.f32.mrb[0].mxu0
        %v2559 = vpop.f32.mrb[0].mxu0
        %v2560 = vadd.f32 %v2480, %v2559
        %v2561 = vpop.f32.mrb[0].mxu0
        %2562 = vmatprep.mubr.bf16.mxu0 0
        %2563 = vmatmul.mubr.bf16.gmra.mrb[0].mxu0 %v2504
        %v2564 = vpop.f32.mrb[0].mxu0
        %v2565 = vadd.f32 %v2480, %v2564
        %v2566 = vpop.f32.mrb[0].mxu0
        %v2567 = vpop.f32.mrb[0].mxu0
        %v2568 = vadd.f32 %v2480, %v2567
        %v2569 = vpop.f32.mrb[0].mxu0
        %2570 = vdwg.mxu0
        %2571 = vst.msk [vmem:[%s268] sm:$0xff] %vm322, %v2541
        %2572 = vst.msk [vmem:[%s268 + $0x8] sm:$0xff] %vm322, %v2544
        %2573 = vst.msk [vmem:[%s268 + $0x10] sm:$0xff] %vm322, %v2549
        %2574 = vst.msk [vmem:[%s268 + $0x18] sm:$0xff] %vm322, %v2552
        %2575 = vst.msk [vmem:[%s268 + $0x20] sm:$0xff] %vm322, %v2557
        %2576 = vst.msk [vmem:[%s268 + $0x28] sm:$0xff] %vm322, %v2560
        %2577 = vst.msk [vmem:[%s268 + $0x30] sm:$0xff] %vm322, %v2565
        %2578 = vst.msk [vmem:[%s268 + $0x38] sm:$0xff] %vm322, %v2568
        %s2579 = smul.u32 8, %s18
        %p2580 = scmp.lt.s32.totalorder %s2579, 15
        %s2581 = scalar_select %p2580, %s2579, 15
        %s2582 = smul.addr %s2581, 8
        %s2583 = scalar_lea.vmem %s6, %s2582
        // Predicated region
        $region49: #{tpu_custom_call.1} parent=43 // pred_check
          %p2584 = pneg %p167
        $region50: #{tpu_custom_call.1} parent=43 // pred_check_branch
          %2586 = sbr.rel (%p2584) target = $region52
        $region51: #{tpu_custom_call.1} parent=43 // pred_region
          %s2587 = smul.u32 8, %s18
        $region52: #{tpu_custom_call.1} parent=43 // pred_fallthru
          _
      $region44: #{tpu_custom_call.1} parent=5 // pred_fallthru
        _
      %p2588 = scmp.le.s32.totalorder 2, %s13
      // Predicated region
      $region53: #{tpu_custom_call.1} parent=5 // pred_check
        %p2589 = pneg %p2588
      $region54: #{tpu_custom_call.1} parent=5 // pred_check_branch
        %2591 = sbr.rel (%p2589) target = $region56
      $region55: #{tpu_custom_call.1} parent=5 // pred_region
        %s2592 = ssub.s32 %s13, 2
        // Predicated region
        $region57: #{tpu_custom_call.1} parent=55 // pred_check
          %p2593 = pneg %p173
        $region58: #{tpu_custom_call.1} parent=55 // pred_check_branch
          %2595 = sbr.rel (%p2593) target = $region60
        $region59: #{tpu_custom_call.1} parent=55 // pred_region
          %s2596 = smul.u32 8, %s19
          %p2597 = scmp.lt.s32.totalorder %s2596, 15
          %s2598 = scalar_select %p2597, %s2596, 15
          %s2599 = smul.addr %s2598, 8
          %s2600 = scalar_lea.vmem %s6, %s2599
        $region60: #{tpu_custom_call.1} parent=55 // pred_fallthru
          _
      $region56: #{tpu_custom_call.1} parent=5 // pred_fallthru
        _
    $region6: #{tpu_custom_call.1} parent=1 // loop_footer
      %s17 = sadd.s32 1, %s13
    $region7: #{tpu_custom_call.1} parent=1 // loop_footer_branch
      %12 = sbr.rel target = $region3
    $region8: #{tpu_custom_call.1} parent=1 // loop_exit
      _
    %2601 = vsyncpa [#allocation3], 1
    %s2602 = scalar_lea.sflag [#allocation3], 1
    %2603 = vsyncpa %s2602, 1

</llo_original>
